<compile_context>
chip_gen: v5e
topology: v5e:2x2
jax: 0.10.0
libtpu: 0.0.40
codegen_flags: <defaults>
</compile_context>

<pallas_src>
import functools

import jax
import jax.numpy as jnp
from jax import lax
from jax.experimental import pallas as pl
from jax.experimental.pallas import tpu as pltpu


# ----------------------------- Pallas kernel -----------------------------

def _traj_lstm_kernel(T, future, Bp, D, H,
                      x_ref, wih0_ref, whh0_ref, wih1_ref, whh1_ref,
                      b0_ref, b1_ref, wl_ref, bl_ref,
                      out_ref, pre_ref, h2all_ref):
    # Hoist every weight / bias load (and in-loop bias broadcast) out of the
    # serial recurrence.
    wih0 = wih0_ref[...]            # (D, 4H)
    whh0 = whh0_ref[...]            # (H, 4H)
    wih1 = wih1_ref[...]            # (H, 4H)
    whh1 = whh1_ref[...]            # (H, 4H)
    b0 = b0_ref[...]                # (1, 4H)
    b1 = b1_ref[...]                # (1, 4H)
    wl = wl_ref[...]                # (H, D)
    bl = bl_ref[...]                # (1, D)
    b0_row = jnp.broadcast_to(b0, (Bp, 4 * H))
    b1_row = jnp.broadcast_to(b1, (Bp, 4 * H))
    bl_row = jnp.broadcast_to(bl, (Bp, D))

    # Prologue: layer-0 input projection (+ bias) for all observed steps in
    # one (T*Bp, D) @ (D, 4H) matmul -> off the serial critical path.
    pre_ref[...] = (jnp.dot(x_ref[...], wih0,
                            preferred_element_type=jnp.float32) + b0)

    def act(gates):
        # Gate column order (i, f, o, g): one sigmoid sweep + one tanh sweep.
        sig = jax.nn.sigmoid(gates[:, :3 * H])
        g = jnp.tanh(gates[:, 3 * H:])
        return sig[:, :H], sig[:, H:2 * H], sig[:, 2 * H:], g

    def cell1(h1, h2, c2):
        # Layer-1 gates as two independent MXU pushes (no concatenate on the
        # dependency chain).
        gates1 = (jnp.dot(h1, wih1, preferred_element_type=jnp.float32)
                  + jnp.dot(h2, whh1, preferred_element_type=jnp.float32)
                  + b1_row)
        i1, f1, o1, g1 = act(gates1)
        c2 = f1 * c2 + i1 * g1
        h2 = o1 * jnp.tanh(c2)
        return h2, c2

    zeros_h = jnp.zeros((Bp, H), jnp.float32)
    zeros_g = jnp.zeros((Bp, 4 * H), jnp.float32)
    obs_unroll = T if T <= 16 else 8
    fut_unroll = max(1, future) if future <= 16 else 8

    # ---------------- observed steps (wavefront-pipelined) ----------------
    # r0 carries h1(t-1) @ W_hh0: the layer-0 recurrent dot for step t is
    # issued as soon as h1(t-1) is ready, overlapping layer-1 of step t-1.
    def obs_body(t, carry):
        h1, c1, h2, c2, r0 = carry
        row = pl.multiple_of(t * Bp, 8)
        gates0 = pre_ref[pl.ds(row, Bp), :] + r0
        i0, f0, o0, g0 = act(gates0)
        c1 = f0 * c1 + i0 * g0
        h1 = o0 * jnp.tanh(c1)
        # Next step's layer-0 recurrent term: independent of layer-1 below.
        r0_next = jnp.dot(h1, whh0, preferred_element_type=jnp.float32)
        h2, c2 = cell1(h1, h2, c2)
        h2all_ref[pl.ds(row, Bp), :] = h2
        return h1, c1, h2, c2, r0_next

    h1, c1, h2, c2, r0 = lax.fori_loop(
        0, T, obs_body, (zeros_h, zeros_h, zeros_h, zeros_h, zeros_g),
        unroll=obs_unroll)

    # ---------------- autoregressive future steps ----------------
    if future > 0:
        prev = jnp.dot(h2, wl, preferred_element_type=jnp.float32) + bl_row

        def fut_body(j, carry):
            h1, c1, h2, c2, prev, r0 = carry
            gates0 = (r0
                      + jnp.dot(prev, wih0, preferred_element_type=jnp.float32)
                      + b0_row)
            i0, f0, o0, g0 = act(gates0)
            c1 = f0 * c1 + i0 * g0
            h1 = o0 * jnp.tanh(c1)
            r0_next = jnp.dot(h1, whh0, preferred_element_type=jnp.float32)
            h2, c2 = cell1(h1, h2, c2)
            row = pl.multiple_of((T + j) * Bp, 8)
            h2all_ref[pl.ds(row, Bp), :] = h2
            # Head matmul kept in-loop only for the autoregressive feedback;
            # the stored output comes from the batched epilogue below.
            out = jnp.dot(h2, wl, preferred_element_type=jnp.float32) + bl_row
            return h1, c1, h2, c2, out, r0_next

        lax.fori_loop(0, future, fut_body, (h1, c1, h2, c2, prev, r0),
                      unroll=fut_unroll)

    # Epilogue: output head for ALL steps in a single
    # ((T+future)*Bp, H) @ (H, D) matmul and one contiguous store
    # (replaces per-step masked vst.msk stores).
    out_ref[...] = (jnp.dot(h2all_ref[...], wl,
                            preferred_element_type=jnp.float32)
                    + bl).astype(out_ref.dtype)


# ------------------------------ Wrapper ----------------------------------

def traj_lstm_forward(x, packed, future=0):
    """x: (B, T, D) float32 -> (B, T + future, D) float32."""
    B, T, D = x.shape
    H = packed["w_lin_t"].shape[0]
    n_steps = T + future
    Bp = max(8, ((B + 7) // 8) * 8)          # pad batch to sublane width

    x = x.astype(jnp.float32)
    if Bp != B:
        x = jnp.pad(x, ((0, Bp - B), (0, 0), (0, 0)))
    # Time-major, flattened to (T*Bp, D): every step is an aligned 8-row
    # sublane block.
    x_flat = jnp.transpose(x, (1, 0, 2)).reshape(T * Bp, D)

    full2 = lambda i: (0, 0)  # noqa: E731  (whole-array blocks, grid=(1,))

    # Explicit VMEM budget: resident x/out (double-buffered), weights,
    # hoisted pre-gates and the h2 buffer, with headroom; capped to the v7x
    # physical budget.
    f32 = 4
    weight_elems = ((D + 3 * H) * 4 * H     # wih0 + whh0 + wih1 + whh1
                    + 2 * 4 * H             # b0, b1
                    + H * D + D)            # w_lin_t, b_lin
    vmem_need = f32 * (2 * T * Bp * D
                       + 2 * n_steps * Bp * D
                       + 2 * weight_elems
                       + T * Bp * 4 * H
                       + n_steps * Bp * H)
    vmem_limit = int(min(64 * 1024 * 1024,
                         max(32 * 1024 * 1024, 2 * vmem_need + (4 << 20))))

    out_flat = pl.pallas_call(
        functools.partial(_traj_lstm_kernel, T, future, Bp, D, H),
        out_shape=jax.ShapeDtypeStruct((n_steps * Bp, D), jnp.float32),
        grid_spec=pltpu.PrefetchScalarGridSpec(
            num_scalar_prefetch=0,
            grid=(1,),
            in_specs=[
                pl.BlockSpec((T * Bp, D), full2),        # x_flat
                pl.BlockSpec((D, 4 * H), full2),         # wih0_t
                pl.BlockSpec((H, 4 * H), full2),         # whh0_t
                pl.BlockSpec((H, 4 * H), full2),         # wih1_t
                pl.BlockSpec((H, 4 * H), full2),         # whh1_t
                pl.BlockSpec((1, 4 * H), full2),         # b0
                pl.BlockSpec((1, 4 * H), full2),         # b1
                pl.BlockSpec((H, D), full2),             # w_lin_t
                pl.BlockSpec((1, D), full2),             # b_lin
            ],
            out_specs=pl.BlockSpec((n_steps * Bp, D), full2),
            scratch_shapes=[
                pltpu.VMEM((T * Bp, 4 * H), jnp.float32),      # layer-0 pre-gates
                pltpu.VMEM((n_steps * Bp, H), jnp.float32),    # all h2 (obs + future)
            ],
        ),
        compiler_params=pltpu.CompilerParams(
            dimension_semantics=("arbitrary",),
            vmem_limit_bytes=vmem_limit),
    )(x_flat, packed["wih0_t"], packed["whh0_t"],
      packed["wih1_t"], packed["whh1_t"],
      packed["b0"], packed["b1"],
      packed["w_lin_t"], packed["b_lin"])

    out = out_flat.reshape(n_steps, Bp, D)
    return jnp.transpose(out, (1, 0, 2))[:B]   # (B, T+future, D)


# --------------------------- Parameter handling ----------------------------

def init_params(key, input_size, hidden_size):
    """Raw parameters with PyTorch nn.LSTMCell / nn.Linear shapes."""
    H, D = hidden_size, input_size
    bound = 1.0 / jnp.sqrt(jnp.float32(H))
    ks = jax.random.split(key, 10)
    u = lambda k, s: jax.random.uniform(  # noqa: E731
        k, s, jnp.float32, minval=-bound, maxval=bound)
    return dict(
        w_ih0=u(ks[0], (4 * H, D)), w_hh0=u(ks[1], (4 * H, H)),
        b_ih0=u(ks[2], (4 * H,)), b_hh0=u(ks[3], (4 * H,)),
        w_ih1=u(ks[4], (4 * H, H)), w_hh1=u(ks[5], (4 * H, H)),
        b_ih1=u(ks[6], (4 * H,)), b_hh1=u(ks[7], (4 * H,)),
        w_lin=u(ks[8], (D, H)), b_lin=u(ks[9], (D,)),
    )


def _reorder_gate_cols(w_t, H):
    """Permute gate columns (i, f, g, o) -> (i, f, o, g)."""
    return jnp.concatenate(
        [w_t[..., :2 * H], w_t[..., 3 * H:], w_t[..., 2 * H:3 * H]], axis=-1)


def pack_params(raw):
    """Pre-transpose weights, fold biases, reorder gate columns."""
    H = raw["w_hh0"].shape[1]
    reord = lambda w: _reorder_gate_cols(w, H)  # noqa: E731
    return dict(
        wih0_t=reord(raw["w_ih0"].T),                      # (D, 4H)
        whh0_t=reord(raw["w_hh0"].T),                      # (H, 4H)
        wih1_t=reord(raw["w_ih1"].T),                      # (H, 4H)
        whh1_t=reord(raw["w_hh1"].T),                      # (H, 4H)
        b0=reord((raw["b_ih0"] + raw["b_hh0"])[None, :]),  # (1, 4H)
        b1=reord((raw["b_ih1"] + raw["b_hh1"])[None, :]),  # (1, 4H)
        w_lin_t=raw["w_lin"].T,                            # (H, D)
        b_lin=raw["b_lin"][None, :],                       # (1, D)
    )


# --------------------------- Pure-JAX reference ---------------------------

def traj_lstm_reference(x, p, future=0):
    """Direct port of the PyTorch forward (gate order i, f, g, o)."""
    B, T, D = x.shape
    H = p["w_hh0"].shape[1]

    def cell(xv, h, c, w_ih, w_hh, b_ih, b_hh):
        g = xv @ w_ih.T + b_ih + h @ w_hh.T + b_hh
        i = jax.nn.sigmoid(g[:, :H])
        f = jax.nn.sigmoid(g[:, H:2 * H])
        gg = jnp.tanh(g[:, 2 * H:3 * H])
        o = jax.nn.sigmoid(g[:, 3 * H:])
        c_new = f * c + i * gg
        return o * jnp.tanh(c_new), c_new

    h1 = c1 = h2 = c2 = jnp.zeros((B, H), jnp.float32)
    outs, out = [], None
    for t in range(T):
        h1, c1 = cell(x[:, t], h1, c1, p["w_ih0"], p["w_hh0"],
                      p["b_ih0"], p["b_hh0"])
        h2, c2 = cell(h1, h2, c2, p["w_ih1"], p["w_hh1"],
                      p["b_ih1"], p["b_hh1"])
        out = h2 @ p["w_lin"].T + p["b_lin"]
        outs.append(out)
    for _ in range(future):
        h1, c1 = cell(out, h1, c1, p["w_ih0"], p["w_hh0"],
                      p["b_ih0"], p["b_hh0"])
        h2, c2 = cell(h1, h2, c2, p["w_ih1"], p["w_hh1"],
                      p["b_ih1"], p["b_hh1"])
        out = h2 @ p["w_lin"].T + p["b_lin"]
        outs.append(out)
    return jnp.stack(outs, axis=1)


# --------------------------------- Main -----------------------------------

if __name__ == "__main__":
    B, T, D, H = 2, 8, 4, 32
    FUTURE = 3

    key = jax.random.PRNGKey(0)
    k_x, k_p = jax.random.split(key)
    x = jax.random.normal(k_x, (B, T, D), jnp.float32)

    raw = init_params(k_p, input_size=D, hidden_size=H)
    packed = pack_params(raw)

    out = traj_lstm_forward(x, packed, future=FUTURE)
    out = jax.block_until_ready(out)

    ref = traj_lstm_reference(x, raw, future=FUTURE)
    assert out.shape == (B, T + FUTURE, D), out.shape
    err = float(jnp.max(jnp.abs(out - ref)))
    assert err < 5e-5, err

    print("KERNEL_OK")
</pallas_src>

<mosaic_0001>
module attributes {stable_mosaic.version = 11 : i64} {
  func.func @_traj_lstm_kernel(%arg0: i32, %arg1: memref<64x4xf32, #tpu.memory_space<vmem>>, %arg2: memref<4x128xf32, #tpu.memory_space<vmem>>, %arg3: memref<32x128xf32, #tpu.memory_space<vmem>>, %arg4: memref<32x128xf32, #tpu.memory_space<vmem>>, %arg5: memref<32x128xf32, #tpu.memory_space<vmem>>, %arg6: memref<1x128xf32, #tpu.memory_space<vmem>>, %arg7: memref<1x128xf32, #tpu.memory_space<vmem>>, %arg8: memref<32x4xf32, #tpu.memory_space<vmem>>, %arg9: memref<1x4xf32, #tpu.memory_space<vmem>>, %arg10: memref<88x4xf32, #tpu.memory_space<vmem>>, %arg11: memref<64x128xf32, #tpu.memory_space<vmem>>, %arg12: memref<88x32xf32, #tpu.memory_space<vmem>>) attributes {dimension_semantics = [#tpu.dimension_semantics<arbitrary>], iteration_bounds = array<i64: 1>, scalar_prefetch = 0 : i64, scratch_operands = 2 : i64, tpu.core_type = #tpu.core_type<tc>, window_params = [{pipeline_mode = #tpu.pipeline_mode<synchronous>, transform_indices = @transform_0, window_bounds = array<i64: 64, 4>}, {pipeline_mode = #tpu.pipeline_mode<synchronous>, transform_indices = @transform_1, window_bounds = array<i64: 4, 128>}, {pipeline_mode = #tpu.pipeline_mode<synchronous>, transform_indices = @transform_2, window_bounds = array<i64: 32, 128>}, {pipeline_mode = #tpu.pipeline_mode<synchronous>, transform_indices = @transform_3, window_bounds = array<i64: 32, 128>}, {pipeline_mode = #tpu.pipeline_mode<synchronous>, transform_indices = @transform_4, window_bounds = array<i64: 32, 128>}, {pipeline_mode = #tpu.pipeline_mode<synchronous>, transform_indices = @transform_5, window_bounds = array<i64: 1, 128>}, {pipeline_mode = #tpu.pipeline_mode<synchronous>, transform_indices = @transform_6, window_bounds = array<i64: 1, 128>}, {pipeline_mode = #tpu.pipeline_mode<synchronous>, transform_indices = @transform_7, window_bounds = array<i64: 32, 4>}, {pipeline_mode = #tpu.pipeline_mode<synchronous>, transform_indices = @transform_8, window_bounds = array<i64: 1, 4>}, {pipeline_mode = #tpu.pipeline_mode<synchronous>, transform_indices = @transform_9, window_bounds = array<i64: 88, 4>}]} {
    %c0 = arith.constant 0 : index
    %c0_0 = arith.constant 0 : index
    %0 = vector.load %arg2[%c0, %c0_0] : memref<4x128xf32, #tpu.memory_space<vmem>>, vector<4x128xf32>
    %c0_1 = arith.constant 0 : index
    %c0_2 = arith.constant 0 : index
    %1 = vector.load %arg3[%c0_1, %c0_2] : memref<32x128xf32, #tpu.memory_space<vmem>>, vector<32x128xf32>
    %c0_3 = arith.constant 0 : index
    %c0_4 = arith.constant 0 : index
    %2 = vector.load %arg4[%c0_3, %c0_4] : memref<32x128xf32, #tpu.memory_space<vmem>>, vector<32x128xf32>
    %c0_5 = arith.constant 0 : index
    %c0_6 = arith.constant 0 : index
    %3 = vector.load %arg5[%c0_5, %c0_6] : memref<32x128xf32, #tpu.memory_space<vmem>>, vector<32x128xf32>
    %c0_7 = arith.constant 0 : index
    %c0_8 = arith.constant 0 : index
    %4 = vector.load %arg6[%c0_7, %c0_8] : memref<1x128xf32, #tpu.memory_space<vmem>>, vector<1x128xf32>
    %c0_9 = arith.constant 0 : index
    %c0_10 = arith.constant 0 : index
    %5 = vector.load %arg7[%c0_9, %c0_10] : memref<1x128xf32, #tpu.memory_space<vmem>>, vector<1x128xf32>
    %c0_11 = arith.constant 0 : index
    %c0_12 = arith.constant 0 : index
    %6 = vector.load %arg8[%c0_11, %c0_12] : memref<32x4xf32, #tpu.memory_space<vmem>>, vector<32x4xf32>
    %c0_13 = arith.constant 0 : index
    %c0_14 = arith.constant 0 : index
    %7 = vector.load %arg9[%c0_13, %c0_14] : memref<1x4xf32, #tpu.memory_space<vmem>>, vector<1x4xf32>
    %8 = vector.shape_cast %4 : vector<1x128xf32> to vector<1x128xf32>
    %9 = vector.broadcast %8 : vector<1x128xf32> to vector<8x128xf32>
    %10 = vector.shape_cast %5 : vector<1x128xf32> to vector<1x128xf32>
    %11 = vector.broadcast %10 : vector<1x128xf32> to vector<8x128xf32>
    %12 = vector.shape_cast %7 : vector<1x4xf32> to vector<1x4xf32>
    %13 = vector.broadcast %12 : vector<1x4xf32> to vector<8x4xf32>
    %c0_15 = arith.constant 0 : index
    %c0_16 = arith.constant 0 : index
    %14 = vector.load %arg1[%c0_15, %c0_16] : memref<64x4xf32, #tpu.memory_space<vmem>>, vector<64x4xf32>
    %cst = arith.constant dense<0.000000e+00> : vector<64x128xf32>
    %15 = tpu.matmul %14, %0, %cst {dimension_numbers = #tpu.dot_dimension_numbers<[1], [0], [0], [1], [0, 0, 1, 1], [], []>} : vector<64x4xf32>, vector<4x128xf32>, vector<64x128xf32> -> vector<64x128xf32>
    %16 = vector.broadcast %4 : vector<1x128xf32> to vector<64x128xf32>
    %17 = arith.addf %15, %16 : vector<64x128xf32>
    %c0_17 = arith.constant 0 : index
    %c0_18 = arith.constant 0 : index
    %18 = vector.load %arg11[%c0_17, %c0_18] : memref<64x128xf32, #tpu.memory_space<vmem>>, vector<64x128xf32>
    tpu.vector_store %arg11[%c0_17, %c0_18], %17 {strides = array<i32>} : memref<64x128xf32, #tpu.memory_space<vmem>>, vector<64x128xf32>,
    %cst_19 = arith.constant 0.000000e+00 : f32
    %19 = vector.broadcast %cst_19 : f32 to vector<8x32xf32>
    %cst_20 = arith.constant 0.000000e+00 : f32
    %20 = vector.broadcast %cst_20 : f32 to vector<8x128xf32>
    %c0_i32 = arith.constant 0 : i32
    %c8_i32 = arith.constant 8 : i32
    %21 = arith.muli %c0_i32, %c8_i32 : i32
    %22 = tpu.assume_multiple %21, 8 : i32
    %23 = arith.index_cast %22 : i32 to index
    %c0_21 = arith.constant 0 : index
    %24 = vector.load %arg11[%23, %c0_21] : memref<64x128xf32, #tpu.memory_space<vmem>>, vector<8x128xf32>
    %25 = arith.addf %24, %20 : vector<8x128xf32>
    %26 = vector.extract_strided_slice %25 {offsets = [0, 0], sizes = [8, 96], strides = [1, 1]} : vector<8x128xf32> to vector<8x96xf32>
    %27 = arith.negf %26 : vector<8x96xf32>
    %28 = math.exp %27 : vector<8x96xf32>
    %cst_22 = arith.constant 1.000000e+00 : f32
    %29 = vector.broadcast %cst_22 : f32 to vector<8x96xf32>
    %30 = arith.addf %29, %28 : vector<8x96xf32>
    %31 = arith.divf %29, %30 : vector<8x96xf32>
    %32 = vector.extract_strided_slice %25 {offsets = [0, 96], sizes = [8, 32], strides = [1, 1]} : vector<8x128xf32> to vector<8x32xf32>
    %33 = math.tanh %32 : vector<8x32xf32>
    %34 = vector.extract_strided_slice %31 {offsets = [0, 0], sizes = [8, 32], strides = [1, 1]} : vector<8x96xf32> to vector<8x32xf32>
    %35 = vector.extract_strided_slice %31 {offsets = [0, 32], sizes = [8, 32], strides = [1, 1]} : vector<8x96xf32> to vector<8x32xf32>
    %36 = vector.extract_strided_slice %31 {offsets = [0, 64], sizes = [8, 32], strides = [1, 1]} : vector<8x96xf32> to vector<8x32xf32>
    %37 = arith.mulf %35, %19 : vector<8x32xf32>
    %38 = arith.mulf %34, %33 : vector<8x32xf32>
    %39 = arith.addf %37, %38 : vector<8x32xf32>
    %40 = math.tanh %39 : vector<8x32xf32>
    %41 = arith.mulf %36, %40 : vector<8x32xf32>
    %cst_23 = arith.constant dense<0.000000e+00> : vector<8x128xf32>
    %42 = tpu.matmul %41, %1, %cst_23 {dimension_numbers = #tpu.dot_dimension_numbers<[1], [0], [0], [1], [0, 0, 1, 1], [], []>} : vector<8x32xf32>, vector<32x128xf32>, vector<8x128xf32> -> vector<8x128xf32>
    %cst_24 = arith.constant dense<0.000000e+00> : vector<8x128xf32>
    %43 = tpu.matmul %41, %2, %cst_24 {dimension_numbers = #tpu.dot_dimension_numbers<[1], [0], [0], [1], [0, 0, 1, 1], [], []>} : vector<8x32xf32>, vector<32x128xf32>, vector<8x128xf32> -> vector<8x128xf32>
    %cst_25 = arith.constant dense<0.000000e+00> : vector<8x128xf32>
    %44 = tpu.matmul %19, %3, %cst_25 {dimension_numbers = #tpu.dot_dimension_numbers<[1], [0], [0], [1], [0, 0, 1, 1], [], []>} : vector<8x32xf32>, vector<32x128xf32>, vector<8x128xf32> -> vector<8x128xf32>
    %45 = arith.addf %43, %44 : vector<8x128xf32>
    %46 = arith.addf %45, %11 : vector<8x128xf32>
    %47 = vector.extract_strided_slice %46 {offsets = [0, 0], sizes = [8, 96], strides = [1, 1]} : vector<8x128xf32> to vector<8x96xf32>
    %48 = arith.negf %47 : vector<8x96xf32>
    %49 = math.exp %48 : vector<8x96xf32>
    %cst_26 = arith.constant 1.000000e+00 : f32
    %50 = vector.broadcast %cst_26 : f32 to vector<8x96xf32>
    %51 = arith.addf %50, %49 : vector<8x96xf32>
    %52 = arith.divf %50, %51 : vector<8x96xf32>
    %53 = vector.extract_strided_slice %46 {offsets = [0, 96], sizes = [8, 32], strides = [1, 1]} : vector<8x128xf32> to vector<8x32xf32>
    %54 = math.tanh %53 : vector<8x32xf32>
    %55 = vector.extract_strided_slice %52 {offsets = [0, 0], sizes = [8, 32], strides = [1, 1]} : vector<8x96xf32> to vector<8x32xf32>
    %56 = vector.extract_strided_slice %52 {offsets = [0, 32], sizes = [8, 32], strides = [1, 1]} : vector<8x96xf32> to vector<8x32xf32>
    %57 = vector.extract_strided_slice %52 {offsets = [0, 64], sizes = [8, 32], strides = [1, 1]} : vector<8x96xf32> to vector<8x32xf32>
    %58 = arith.mulf %56, %19 : vector<8x32xf32>
    %59 = arith.mulf %55, %54 : vector<8x32xf32>
    %60 = arith.addf %58, %59 : vector<8x32xf32>
    %61 = math.tanh %60 : vector<8x32xf32>
    %62 = arith.mulf %57, %61 : vector<8x32xf32>
    %63 = arith.index_cast %22 : i32 to index
    %c0_27 = arith.constant 0 : index
    %64 = vector.load %arg12[%63, %c0_27] : memref<88x32xf32, #tpu.memory_space<vmem>>, vector<8x32xf32>
    tpu.vector_store %arg12[%63, %c0_27], %62 {strides = array<i32>} : memref<88x32xf32, #tpu.memory_space<vmem>>, vector<8x32xf32>,
    %c1_i32 = arith.constant 1 : i32
    %c8_i32_28 = arith.constant 8 : i32
    %65 = arith.muli %c1_i32, %c8_i32_28 : i32
    %66 = tpu.assume_multiple %65, 8 : i32
    %67 = arith.index_cast %66 : i32 to index
    %c0_29 = arith.constant 0 : index
    %68 = vector.load %arg11[%67, %c0_29] : memref<64x128xf32, #tpu.memory_space<vmem>>, vector<8x128xf32>
    %69 = arith.addf %68, %42 : vector<8x128xf32>
    %70 = vector.extract_strided_slice %69 {offsets = [0, 0], sizes = [8, 96], strides = [1, 1]} : vector<8x128xf32> to vector<8x96xf32>
    %71 = arith.negf %70 : vector<8x96xf32>
    %72 = math.exp %71 : vector<8x96xf32>
    %cst_30 = arith.constant 1.000000e+00 : f32
    %73 = vector.broadcast %cst_30 : f32 to vector<8x96xf32>
    %74 = arith.addf %73, %72 : vector<8x96xf32>
    %75 = arith.divf %73, %74 : vector<8x96xf32>
    %76 = vector.extract_strided_slice %69 {offsets = [0, 96], sizes = [8, 32], strides = [1, 1]} : vector<8x128xf32> to vector<8x32xf32>
    %77 = math.tanh %76 : vector<8x32xf32>
    %78 = vector.extract_strided_slice %75 {offsets = [0, 0], sizes = [8, 32], strides = [1, 1]} : vector<8x96xf32> to vector<8x32xf32>
    %79 = vector.extract_strided_slice %75 {offsets = [0, 32], sizes = [8, 32], strides = [1, 1]} : vector<8x96xf32> to vector<8x32xf32>
    %80 = vector.extract_strided_slice %75 {offsets = [0, 64], sizes = [8, 32], strides = [1, 1]} : vector<8x96xf32> to vector<8x32xf32>
    %81 = arith.mulf %79, %39 : vector<8x32xf32>
    %82 = arith.mulf %78, %77 : vector<8x32xf32>
    %83 = arith.addf %81, %82 : vector<8x32xf32>
    %84 = math.tanh %83 : vector<8x32xf32>
    %85 = arith.mulf %80, %84 : vector<8x32xf32>
    %cst_31 = arith.constant dense<0.000000e+00> : vector<8x128xf32>
    %86 = tpu.matmul %85, %1, %cst_31 {dimension_numbers = #tpu.dot_dimension_numbers<[1], [0], [0], [1], [0, 0, 1, 1], [], []>} : vector<8x32xf32>, vector<32x128xf32>, vector<8x128xf32> -> vector<8x128xf32>
    %cst_32 = arith.constant dense<0.000000e+00> : vector<8x128xf32>
    %87 = tpu.matmul %85, %2, %cst_32 {dimension_numbers = #tpu.dot_dimension_numbers<[1], [0], [0], [1], [0, 0, 1, 1], [], []>} : vector<8x32xf32>, vector<32x128xf32>, vector<8x128xf32> -> vector<8x128xf32>
    %cst_33 = arith.constant dense<0.000000e+00> : vector<8x128xf32>
    %88 = tpu.matmul %62, %3, %cst_33 {dimension_numbers = #tpu.dot_dimension_numbers<[1], [0], [0], [1], [0, 0, 1, 1], [], []>} : vector<8x32xf32>, vector<32x128xf32>, vector<8x128xf32> -> vector<8x128xf32>
    %89 = arith.addf %87, %88 : vector<8x128xf32>
    %90 = arith.addf %89, %11 : vector<8x128xf32>
    %91 = vector.extract_strided_slice %90 {offsets = [0, 0], sizes = [8, 96], strides = [1, 1]} : vector<8x128xf32> to vector<8x96xf32>
    %92 = arith.negf %91 : vector<8x96xf32>
    %93 = math.exp %92 : vector<8x96xf32>
    %cst_34 = arith.constant 1.000000e+00 : f32
    %94 = vector.broadcast %cst_34 : f32 to vector<8x96xf32>
    %95 = arith.addf %94, %93 : vector<8x96xf32>
    %96 = arith.divf %94, %95 : vector<8x96xf32>
    %97 = vector.extract_strided_slice %90 {offsets = [0, 96], sizes = [8, 32], strides = [1, 1]} : vector<8x128xf32> to vector<8x32xf32>
    %98 = math.tanh %97 : vector<8x32xf32>
    %99 = vector.extract_strided_slice %96 {offsets = [0, 0], sizes = [8, 32], strides = [1, 1]} : vector<8x96xf32> to vector<8x32xf32>
    %100 = vector.extract_strided_slice %96 {offsets = [0, 32], sizes = [8, 32], strides = [1, 1]} : vector<8x96xf32> to vector<8x32xf32>
    %101 = vector.extract_strided_slice %96 {offsets = [0, 64], sizes = [8, 32], strides = [1, 1]} : vector<8x96xf32> to vector<8x32xf32>
    %102 = arith.mulf %100, %60 : vector<8x32xf32>
    %103 = arith.mulf %99, %98 : vector<8x32xf32>
    %104 = arith.addf %102, %103 : vector<8x32xf32>
    %105 = math.tanh %104 : vector<8x32xf32>
    %106 = arith.mulf %101, %105 : vector<8x32xf32>
    %107 = arith.index_cast %66 : i32 to index
    %c0_35 = arith.constant 0 : index
    %108 = vector.load %arg12[%107, %c0_35] : memref<88x32xf32, #tpu.memory_space<vmem>>, vector<8x32xf32>
    tpu.vector_store %arg12[%107, %c0_35], %106 {strides = array<i32>} : memref<88x32xf32, #tpu.memory_space<vmem>>, vector<8x32xf32>,
    %c2_i32 = arith.constant 2 : i32
    %c8_i32_36 = arith.constant 8 : i32
    %109 = arith.muli %c2_i32, %c8_i32_36 : i32
    %110 = tpu.assume_multiple %109, 8 : i32
    %111 = arith.index_cast %110 : i32 to index
    %c0_37 = arith.constant 0 : index
    %112 = vector.load %arg11[%111, %c0_37] : memref<64x128xf32, #tpu.memory_space<vmem>>, vector<8x128xf32>
    %113 = arith.addf %112, %86 : vector<8x128xf32>
    %114 = vector.extract_strided_slice %113 {offsets = [0, 0], sizes = [8, 96], strides = [1, 1]} : vector<8x128xf32> to vector<8x96xf32>
    %115 = arith.negf %114 : vector<8x96xf32>
    %116 = math.exp %115 : vector<8x96xf32>
    %cst_38 = arith.constant 1.000000e+00 : f32
    %117 = vector.broadcast %cst_38 : f32 to vector<8x96xf32>
    %118 = arith.addf %117, %116 : vector<8x96xf32>
    %119 = arith.divf %117, %118 : vector<8x96xf32>
    %120 = vector.extract_strided_slice %113 {offsets = [0, 96], sizes = [8, 32], strides = [1, 1]} : vector<8x128xf32> to vector<8x32xf32>
    %121 = math.tanh %120 : vector<8x32xf32>
    %122 = vector.extract_strided_slice %119 {offsets = [0, 0], sizes = [8, 32], strides = [1, 1]} : vector<8x96xf32> to vector<8x32xf32>
    %123 = vector.extract_strided_slice %119 {offsets = [0, 32], sizes = [8, 32], strides = [1, 1]} : vector<8x96xf32> to vector<8x32xf32>
    %124 = vector.extract_strided_slice %119 {offsets = [0, 64], sizes = [8, 32], strides = [1, 1]} : vector<8x96xf32> to vector<8x32xf32>
    %125 = arith.mulf %123, %83 : vector<8x32xf32>
    %126 = arith.mulf %122, %121 : vector<8x32xf32>
    %127 = arith.addf %125, %126 : vector<8x32xf32>
    %128 = math.tanh %127 : vector<8x32xf32>
    %129 = arith.mulf %124, %128 : vector<8x32xf32>
    %cst_39 = arith.constant dense<0.000000e+00> : vector<8x128xf32>
    %130 = tpu.matmul %129, %1, %cst_39 {dimension_numbers = #tpu.dot_dimension_numbers<[1], [0], [0], [1], [0, 0, 1, 1], [], []>} : vector<8x32xf32>, vector<32x128xf32>, vector<8x128xf32> -> vector<8x128xf32>
    %cst_40 = arith.constant dense<0.000000e+00> : vector<8x128xf32>
    %131 = tpu.matmul %129, %2, %cst_40 {dimension_numbers = #tpu.dot_dimension_numbers<[1], [0], [0], [1], [0, 0, 1, 1], [], []>} : vector<8x32xf32>, vector<32x128xf32>, vector<8x128xf32> -> vector<8x128xf32>
    %cst_41 = arith.constant dense<0.000000e+00> : vector<8x128xf32>
    %132 = tpu.matmul %106, %3, %cst_41 {dimension_numbers = #tpu.dot_dimension_numbers<[1], [0], [0], [1], [0, 0, 1, 1], [], []>} : vector<8x32xf32>, vector<32x128xf32>, vector<8x128xf32> -> vector<8x128xf32>
    %133 = arith.addf %131, %132 : vector<8x128xf32>
    %134 = arith.addf %133, %11 : vector<8x128xf32>
    %135 = vector.extract_strided_slice %134 {offsets = [0, 0], sizes = [8, 96], strides = [1, 1]} : vector<8x128xf32> to vector<8x96xf32>
    %136 = arith.negf %135 : vector<8x96xf32>
    %137 = math.exp %136 : vector<8x96xf32>
    %cst_42 = arith.constant 1.000000e+00 : f32
    %138 = vector.broadcast %cst_42 : f32 to vector<8x96xf32>
    %139 = arith.addf %138, %137 : vector<8x96xf32>
    %140 = arith.divf %138, %139 : vector<8x96xf32>
    %141 = vector.extract_strided_slice %134 {offsets = [0, 96], sizes = [8, 32], strides = [1, 1]} : vector<8x128xf32> to vector<8x32xf32>
    %142 = math.tanh %141 : vector<8x32xf32>
    %143 = vector.extract_strided_slice %140 {offsets = [0, 0], sizes = [8, 32], strides = [1, 1]} : vector<8x96xf32> to vector<8x32xf32>
    %144 = vector.extract_strided_slice %140 {offsets = [0, 32], sizes = [8, 32], strides = [1, 1]} : vector<8x96xf32> to vector<8x32xf32>
    %145 = vector.extract_strided_slice %140 {offsets = [0, 64], sizes = [8, 32], strides = [1, 1]} : vector<8x96xf32> to vector<8x32xf32>
    %146 = arith.mulf %144, %104 : vector<8x32xf32>
    %147 = arith.mulf %143, %142 : vector<8x32xf32>
    %148 = arith.addf %146, %147 : vector<8x32xf32>
    %149 = math.tanh %148 : vector<8x32xf32>
    %150 = arith.mulf %145, %149 : vector<8x32xf32>
    %151 = arith.index_cast %110 : i32 to index
    %c0_43 = arith.constant 0 : index
    %152 = vector.load %arg12[%151, %c0_43] : memref<88x32xf32, #tpu.memory_space<vmem>>, vector<8x32xf32>
    tpu.vector_store %arg12[%151, %c0_43], %150 {strides = array<i32>} : memref<88x32xf32, #tpu.memory_space<vmem>>, vector<8x32xf32>,
    %c3_i32 = arith.constant 3 : i32
    %c8_i32_44 = arith.constant 8 : i32
    %153 = arith.muli %c3_i32, %c8_i32_44 : i32
    %154 = tpu.assume_multiple %153, 8 : i32
    %155 = arith.index_cast %154 : i32 to index
    %c0_45 = arith.constant 0 : index
    %156 = vector.load %arg11[%155, %c0_45] : memref<64x128xf32, #tpu.memory_space<vmem>>, vector<8x128xf32>
    %157 = arith.addf %156, %130 : vector<8x128xf32>
    %158 = vector.extract_strided_slice %157 {offsets = [0, 0], sizes = [8, 96], strides = [1, 1]} : vector<8x128xf32> to vector<8x96xf32>
    %159 = arith.negf %158 : vector<8x96xf32>
    %160 = math.exp %159 : vector<8x96xf32>
    %cst_46 = arith.constant 1.000000e+00 : f32
    %161 = vector.broadcast %cst_46 : f32 to vector<8x96xf32>
    %162 = arith.addf %161, %160 : vector<8x96xf32>
    %163 = arith.divf %161, %162 : vector<8x96xf32>
    %164 = vector.extract_strided_slice %157 {offsets = [0, 96], sizes = [8, 32], strides = [1, 1]} : vector<8x128xf32> to vector<8x32xf32>
    %165 = math.tanh %164 : vector<8x32xf32>
    %166 = vector.extract_strided_slice %163 {offsets = [0, 0], sizes = [8, 32], strides = [1, 1]} : vector<8x96xf32> to vector<8x32xf32>
    %167 = vector.extract_strided_slice %163 {offsets = [0, 32], sizes = [8, 32], strides = [1, 1]} : vector<8x96xf32> to vector<8x32xf32>
    %168 = vector.extract_strided_slice %163 {offsets = [0, 64], sizes = [8, 32], strides = [1, 1]} : vector<8x96xf32> to vector<8x32xf32>
    %169 = arith.mulf %167, %127 : vector<8x32xf32>
    %170 = arith.mulf %166, %165 : vector<8x32xf32>
    %171 = arith.addf %169, %170 : vector<8x32xf32>
    %172 = math.tanh %171 : vector<8x32xf32>
    %173 = arith.mulf %168, %172 : vector<8x32xf32>
    %cst_47 = arith.constant dense<0.000000e+00> : vector<8x128xf32>
    %174 = tpu.matmul %173, %1, %cst_47 {dimension_numbers = #tpu.dot_dimension_numbers<[1], [0], [0], [1], [0, 0, 1, 1], [], []>} : vector<8x32xf32>, vector<32x128xf32>, vector<8x128xf32> -> vector<8x128xf32>
    %cst_48 = arith.constant dense<0.000000e+00> : vector<8x128xf32>
    %175 = tpu.matmul %173, %2, %cst_48 {dimension_numbers = #tpu.dot_dimension_numbers<[1], [0], [0], [1], [0, 0, 1, 1], [], []>} : vector<8x32xf32>, vector<32x128xf32>, vector<8x128xf32> -> vector<8x128xf32>
    %cst_49 = arith.constant dense<0.000000e+00> : vector<8x128xf32>
    %176 = tpu.matmul %150, %3, %cst_49 {dimension_numbers = #tpu.dot_dimension_numbers<[1], [0], [0], [1], [0, 0, 1, 1], [], []>} : vector<8x32xf32>, vector<32x128xf32>, vector<8x128xf32> -> vector<8x128xf32>
    %177 = arith.addf %175, %176 : vector<8x128xf32>
    %178 = arith.addf %177, %11 : vector<8x128xf32>
    %179 = vector.extract_strided_slice %178 {offsets = [0, 0], sizes = [8, 96], strides = [1, 1]} : vector<8x128xf32> to vector<8x96xf32>
    %180 = arith.negf %179 : vector<8x96xf32>
    %181 = math.exp %180 : vector<8x96xf32>
    %cst_50 = arith.constant 1.000000e+00 : f32
    %182 = vector.broadcast %cst_50 : f32 to vector<8x96xf32>
    %183 = arith.addf %182, %181 : vector<8x96xf32>
    %184 = arith.divf %182, %183 : vector<8x96xf32>
    %185 = vector.extract_strided_slice %178 {offsets = [0, 96], sizes = [8, 32], strides = [1, 1]} : vector<8x128xf32> to vector<8x32xf32>
    %186 = math.tanh %185 : vector<8x32xf32>
    %187 = vector.extract_strided_slice %184 {offsets = [0, 0], sizes = [8, 32], strides = [1, 1]} : vector<8x96xf32> to vector<8x32xf32>
    %188 = vector.extract_strided_slice %184 {offsets = [0, 32], sizes = [8, 32], strides = [1, 1]} : vector<8x96xf32> to vector<8x32xf32>
    %189 = vector.extract_strided_slice %184 {offsets = [0, 64], sizes = [8, 32], strides = [1, 1]} : vector<8x96xf32> to vector<8x32xf32>
    %190 = arith.mulf %188, %148 : vector<8x32xf32>
    %191 = arith.mulf %187, %186 : vector<8x32xf32>
    %192 = arith.addf %190, %191 : vector<8x32xf32>
    %193 = math.tanh %192 : vector<8x32xf32>
    %194 = arith.mulf %189, %193 : vector<8x32xf32>
    %195 = arith.index_cast %154 : i32 to index
    %c0_51 = arith.constant 0 : index
    %196 = vector.load %arg12[%195, %c0_51] : memref<88x32xf32, #tpu.memory_space<vmem>>, vector<8x32xf32>
    tpu.vector_store %arg12[%195, %c0_51], %194 {strides = array<i32>} : memref<88x32xf32, #tpu.memory_space<vmem>>, vector<8x32xf32>,
    %c4_i32 = arith.constant 4 : i32
    %c8_i32_52 = arith.constant 8 : i32
    %197 = arith.muli %c4_i32, %c8_i32_52 : i32
    %198 = tpu.assume_multiple %197, 8 : i32
    %199 = arith.index_cast %198 : i32 to index
    %c0_53 = arith.constant 0 : index
    %200 = vector.load %arg11[%199, %c0_53] : memref<64x128xf32, #tpu.memory_space<vmem>>, vector<8x128xf32>
    %201 = arith.addf %200, %174 : vector<8x128xf32>
    %202 = vector.extract_strided_slice %201 {offsets = [0, 0], sizes = [8, 96], strides = [1, 1]} : vector<8x128xf32> to vector<8x96xf32>
    %203 = arith.negf %202 : vector<8x96xf32>
    %204 = math.exp %203 : vector<8x96xf32>
    %cst_54 = arith.constant 1.000000e+00 : f32
    %205 = vector.broadcast %cst_54 : f32 to vector<8x96xf32>
    %206 = arith.addf %205, %204 : vector<8x96xf32>
    %207 = arith.divf %205, %206 : vector<8x96xf32>
    %208 = vector.extract_strided_slice %201 {offsets = [0, 96], sizes = [8, 32], strides = [1, 1]} : vector<8x128xf32> to vector<8x32xf32>
    %209 = math.tanh %208 : vector<8x32xf32>
    %210 = vector.extract_strided_slice %207 {offsets = [0, 0], sizes = [8, 32], strides = [1, 1]} : vector<8x96xf32> to vector<8x32xf32>
    %211 = vector.extract_strided_slice %207 {offsets = [0, 32], sizes = [8, 32], strides = [1, 1]} : vector<8x96xf32> to vector<8x32xf32>
    %212 = vector.extract_strided_slice %207 {offsets = [0, 64], sizes = [8, 32], strides = [1, 1]} : vector<8x96xf32> to vector<8x32xf32>
    %213 = arith.mulf %211, %171 : vector<8x32xf32>
    %214 = arith.mulf %210, %209 : vector<8x32xf32>
    %215 = arith.addf %213, %214 : vector<8x32xf32>
    %216 = math.tanh %215 : vector<8x32xf32>
    %217 = arith.mulf %212, %216 : vector<8x32xf32>
    %cst_55 = arith.constant dense<0.000000e+00> : vector<8x128xf32>
    %218 = tpu.matmul %217, %1, %cst_55 {dimension_numbers = #tpu.dot_dimension_numbers<[1], [0], [0], [1], [0, 0, 1, 1], [], []>} : vector<8x32xf32>, vector<32x128xf32>, vector<8x128xf32> -> vector<8x128xf32>
    %cst_56 = arith.constant dense<0.000000e+00> : vector<8x128xf32>
    %219 = tpu.matmul %217, %2, %cst_56 {dimension_numbers = #tpu.dot_dimension_numbers<[1], [0], [0], [1], [0, 0, 1, 1], [], []>} : vector<8x32xf32>, vector<32x128xf32>, vector<8x128xf32> -> vector<8x128xf32>
    %cst_57 = arith.constant dense<0.000000e+00> : vector<8x128xf32>
    %220 = tpu.matmul %194, %3, %cst_57 {dimension_numbers = #tpu.dot_dimension_numbers<[1], [0], [0], [1], [0, 0, 1, 1], [], []>} : vector<8x32xf32>, vector<32x128xf32>, vector<8x128xf32> -> vector<8x128xf32>
    %221 = arith.addf %219, %220 : vector<8x128xf32>
    %222 = arith.addf %221, %11 : vector<8x128xf32>
    %223 = vector.extract_strided_slice %222 {offsets = [0, 0], sizes = [8, 96], strides = [1, 1]} : vector<8x128xf32> to vector<8x96xf32>
    %224 = arith.negf %223 : vector<8x96xf32>
    %225 = math.exp %224 : vector<8x96xf32>
    %cst_58 = arith.constant 1.000000e+00 : f32
    %226 = vector.broadcast %cst_58 : f32 to vector<8x96xf32>
    %227 = arith.addf %226, %225 : vector<8x96xf32>
    %228 = arith.divf %226, %227 : vector<8x96xf32>
    %229 = vector.extract_strided_slice %222 {offsets = [0, 96], sizes = [8, 32], strides = [1, 1]} : vector<8x128xf32> to vector<8x32xf32>
    %230 = math.tanh %229 : vector<8x32xf32>
    %231 = vector.extract_strided_slice %228 {offsets = [0, 0], sizes = [8, 32], strides = [1, 1]} : vector<8x96xf32> to vector<8x32xf32>
    %232 = vector.extract_strided_slice %228 {offsets = [0, 32], sizes = [8, 32], strides = [1, 1]} : vector<8x96xf32> to vector<8x32xf32>
    %233 = vector.extract_strided_slice %228 {offsets = [0, 64], sizes = [8, 32], strides = [1, 1]} : vector<8x96xf32> to vector<8x32xf32>
    %234 = arith.mulf %232, %192 : vector<8x32xf32>
    %235 = arith.mulf %231, %230 : vector<8x32xf32>
    %236 = arith.addf %234, %235 : vector<8x32xf32>
    %237 = math.tanh %236 : vector<8x32xf32>
    %238 = arith.mulf %233, %237 : vector<8x32xf32>
    %239 = arith.index_cast %198 : i32 to index
    %c0_59 = arith.constant 0 : index
    %240 = vector.load %arg12[%239, %c0_59] : memref<88x32xf32, #tpu.memory_space<vmem>>, vector<8x32xf32>
    tpu.vector_store %arg12[%239, %c0_59], %238 {strides = array<i32>} : memref<88x32xf32, #tpu.memory_space<vmem>>, vector<8x32xf32>,
    %c5_i32 = arith.constant 5 : i32
    %c8_i32_60 = arith.constant 8 : i32
    %241 = arith.muli %c5_i32, %c8_i32_60 : i32
    %242 = tpu.assume_multiple %241, 8 : i32
    %243 = arith.index_cast %242 : i32 to index
    %c0_61 = arith.constant 0 : index
    %244 = vector.load %arg11[%243, %c0_61] : memref<64x128xf32, #tpu.memory_space<vmem>>, vector<8x128xf32>
    %245 = arith.addf %244, %218 : vector<8x128xf32>
    %246 = vector.extract_strided_slice %245 {offsets = [0, 0], sizes = [8, 96], strides = [1, 1]} : vector<8x128xf32> to vector<8x96xf32>
    %247 = arith.negf %246 : vector<8x96xf32>
    %248 = math.exp %247 : vector<8x96xf32>
    %cst_62 = arith.constant 1.000000e+00 : f32
    %249 = vector.broadcast %cst_62 : f32 to vector<8x96xf32>
    %250 = arith.addf %249, %248 : vector<8x96xf32>
    %251 = arith.divf %249, %250 : vector<8x96xf32>
    %252 = vector.extract_strided_slice %245 {offsets = [0, 96], sizes = [8, 32], strides = [1, 1]} : vector<8x128xf32> to vector<8x32xf32>
    %253 = math.tanh %252 : vector<8x32xf32>
    %254 = vector.extract_strided_slice %251 {offsets = [0, 0], sizes = [8, 32], strides = [1, 1]} : vector<8x96xf32> to vector<8x32xf32>
    %255 = vector.extract_strided_slice %251 {offsets = [0, 32], sizes = [8, 32], strides = [1, 1]} : vector<8x96xf32> to vector<8x32xf32>
    %256 = vector.extract_strided_slice %251 {offsets = [0, 64], sizes = [8, 32], strides = [1, 1]} : vector<8x96xf32> to vector<8x32xf32>
    %257 = arith.mulf %255, %215 : vector<8x32xf32>
    %258 = arith.mulf %254, %253 : vector<8x32xf32>
    %259 = arith.addf %257, %258 : vector<8x32xf32>
    %260 = math.tanh %259 : vector<8x32xf32>
    %261 = arith.mulf %256, %260 : vector<8x32xf32>
    %cst_63 = arith.constant dense<0.000000e+00> : vector<8x128xf32>
    %262 = tpu.matmul %261, %1, %cst_63 {dimension_numbers = #tpu.dot_dimension_numbers<[1], [0], [0], [1], [0, 0, 1, 1], [], []>} : vector<8x32xf32>, vector<32x128xf32>, vector<8x128xf32> -> vector<8x128xf32>
    %cst_64 = arith.constant dense<0.000000e+00> : vector<8x128xf32>
    %263 = tpu.matmul %261, %2, %cst_64 {dimension_numbers = #tpu.dot_dimension_numbers<[1], [0], [0], [1], [0, 0, 1, 1], [], []>} : vector<8x32xf32>, vector<32x128xf32>, vector<8x128xf32> -> vector<8x128xf32>
    %cst_65 = arith.constant dense<0.000000e+00> : vector<8x128xf32>
    %264 = tpu.matmul %238, %3, %cst_65 {dimension_numbers = #tpu.dot_dimension_numbers<[1], [0], [0], [1], [0, 0, 1, 1], [], []>} : vector<8x32xf32>, vector<32x128xf32>, vector<8x128xf32> -> vector<8x128xf32>
    %265 = arith.addf %263, %264 : vector<8x128xf32>
    %266 = arith.addf %265, %11 : vector<8x128xf32>
    %267 = vector.extract_strided_slice %266 {offsets = [0, 0], sizes = [8, 96], strides = [1, 1]} : vector<8x128xf32> to vector<8x96xf32>
    %268 = arith.negf %267 : vector<8x96xf32>
    %269 = math.exp %268 : vector<8x96xf32>
    %cst_66 = arith.constant 1.000000e+00 : f32
    %270 = vector.broadcast %cst_66 : f32 to vector<8x96xf32>
    %271 = arith.addf %270, %269 : vector<8x96xf32>
    %272 = arith.divf %270, %271 : vector<8x96xf32>
    %273 = vector.extract_strided_slice %266 {offsets = [0, 96], sizes = [8, 32], strides = [1, 1]} : vector<8x128xf32> to vector<8x32xf32>
    %274 = math.tanh %273 : vector<8x32xf32>
    %275 = vector.extract_strided_slice %272 {offsets = [0, 0], sizes = [8, 32], strides = [1, 1]} : vector<8x96xf32> to vector<8x32xf32>
    %276 = vector.extract_strided_slice %272 {offsets = [0, 32], sizes = [8, 32], strides = [1, 1]} : vector<8x96xf32> to vector<8x32xf32>
    %277 = vector.extract_strided_slice %272 {offsets = [0, 64], sizes = [8, 32], strides = [1, 1]} : vector<8x96xf32> to vector<8x32xf32>
    %278 = arith.mulf %276, %236 : vector<8x32xf32>
    %279 = arith.mulf %275, %274 : vector<8x32xf32>
    %280 = arith.addf %278, %279 : vector<8x32xf32>
    %281 = math.tanh %280 : vector<8x32xf32>
    %282 = arith.mulf %277, %281 : vector<8x32xf32>
    %283 = arith.index_cast %242 : i32 to index
    %c0_67 = arith.constant 0 : index
    %284 = vector.load %arg12[%283, %c0_67] : memref<88x32xf32, #tpu.memory_space<vmem>>, vector<8x32xf32>
    tpu.vector_store %arg12[%283, %c0_67], %282 {strides = array<i32>} : memref<88x32xf32, #tpu.memory_space<vmem>>, vector<8x32xf32>,
    %c6_i32 = arith.constant 6 : i32
    %c8_i32_68 = arith.constant 8 : i32
    %285 = arith.muli %c6_i32, %c8_i32_68 : i32
    %286 = tpu.assume_multiple %285, 8 : i32
    %287 = arith.index_cast %286 : i32 to index
    %c0_69 = arith.constant 0 : index
    %288 = vector.load %arg11[%287, %c0_69] : memref<64x128xf32, #tpu.memory_space<vmem>>, vector<8x128xf32>
    %289 = arith.addf %288, %262 : vector<8x128xf32>
    %290 = vector.extract_strided_slice %289 {offsets = [0, 0], sizes = [8, 96], strides = [1, 1]} : vector<8x128xf32> to vector<8x96xf32>
    %291 = arith.negf %290 : vector<8x96xf32>
    %292 = math.exp %291 : vector<8x96xf32>
    %cst_70 = arith.constant 1.000000e+00 : f32
    %293 = vector.broadcast %cst_70 : f32 to vector<8x96xf32>
    %294 = arith.addf %293, %292 : vector<8x96xf32>
    %295 = arith.divf %293, %294 : vector<8x96xf32>
    %296 = vector.extract_strided_slice %289 {offsets = [0, 96], sizes = [8, 32], strides = [1, 1]} : vector<8x128xf32> to vector<8x32xf32>
    %297 = math.tanh %296 : vector<8x32xf32>
    %298 = vector.extract_strided_slice %295 {offsets = [0, 0], sizes = [8, 32], strides = [1, 1]} : vector<8x96xf32> to vector<8x32xf32>
    %299 = vector.extract_strided_slice %295 {offsets = [0, 32], sizes = [8, 32], strides = [1, 1]} : vector<8x96xf32> to vector<8x32xf32>
    %300 = vector.extract_strided_slice %295 {offsets = [0, 64], sizes = [8, 32], strides = [1, 1]} : vector<8x96xf32> to vector<8x32xf32>
    %301 = arith.mulf %299, %259 : vector<8x32xf32>
    %302 = arith.mulf %298, %297 : vector<8x32xf32>
    %303 = arith.addf %301, %302 : vector<8x32xf32>
    %304 = math.tanh %303 : vector<8x32xf32>
    %305 = arith.mulf %300, %304 : vector<8x32xf32>
    %cst_71 = arith.constant dense<0.000000e+00> : vector<8x128xf32>
    %306 = tpu.matmul %305, %1, %cst_71 {dimension_numbers = #tpu.dot_dimension_numbers<[1], [0], [0], [1], [0, 0, 1, 1], [], []>} : vector<8x32xf32>, vector<32x128xf32>, vector<8x128xf32> -> vector<8x128xf32>
    %cst_72 = arith.constant dense<0.000000e+00> : vector<8x128xf32>
    %307 = tpu.matmul %305, %2, %cst_72 {dimension_numbers = #tpu.dot_dimension_numbers<[1], [0], [0], [1], [0, 0, 1, 1], [], []>} : vector<8x32xf32>, vector<32x128xf32>, vector<8x128xf32> -> vector<8x128xf32>
    %cst_73 = arith.constant dense<0.000000e+00> : vector<8x128xf32>
    %308 = tpu.matmul %282, %3, %cst_73 {dimension_numbers = #tpu.dot_dimension_numbers<[1], [0], [0], [1], [0, 0, 1, 1], [], []>} : vector<8x32xf32>, vector<32x128xf32>, vector<8x128xf32> -> vector<8x128xf32>
    %309 = arith.addf %307, %308 : vector<8x128xf32>
    %310 = arith.addf %309, %11 : vector<8x128xf32>
    %311 = vector.extract_strided_slice %310 {offsets = [0, 0], sizes = [8, 96], strides = [1, 1]} : vector<8x128xf32> to vector<8x96xf32>
    %312 = arith.negf %311 : vector<8x96xf32>
    %313 = math.exp %312 : vector<8x96xf32>
    %cst_74 = arith.constant 1.000000e+00 : f32
    %314 = vector.broadcast %cst_74 : f32 to vector<8x96xf32>
    %315 = arith.addf %314, %313 : vector<8x96xf32>
    %316 = arith.divf %314, %315 : vector<8x96xf32>
    %317 = vector.extract_strided_slice %310 {offsets = [0, 96], sizes = [8, 32], strides = [1, 1]} : vector<8x128xf32> to vector<8x32xf32>
    %318 = math.tanh %317 : vector<8x32xf32>
    %319 = vector.extract_strided_slice %316 {offsets = [0, 0], sizes = [8, 32], strides = [1, 1]} : vector<8x96xf32> to vector<8x32xf32>
    %320 = vector.extract_strided_slice %316 {offsets = [0, 32], sizes = [8, 32], strides = [1, 1]} : vector<8x96xf32> to vector<8x32xf32>
    %321 = vector.extract_strided_slice %316 {offsets = [0, 64], sizes = [8, 32], strides = [1, 1]} : vector<8x96xf32> to vector<8x32xf32>
    %322 = arith.mulf %320, %280 : vector<8x32xf32>
    %323 = arith.mulf %319, %318 : vector<8x32xf32>
    %324 = arith.addf %322, %323 : vector<8x32xf32>
    %325 = math.tanh %324 : vector<8x32xf32>
    %326 = arith.mulf %321, %325 : vector<8x32xf32>
    %327 = arith.index_cast %286 : i32 to index
    %c0_75 = arith.constant 0 : index
    %328 = vector.load %arg12[%327, %c0_75] : memref<88x32xf32, #tpu.memory_space<vmem>>, vector<8x32xf32>
    tpu.vector_store %arg12[%327, %c0_75], %326 {strides = array<i32>} : memref<88x32xf32, #tpu.memory_space<vmem>>, vector<8x32xf32>,
    %c7_i32 = arith.constant 7 : i32
    %c8_i32_76 = arith.constant 8 : i32
    %329 = arith.muli %c7_i32, %c8_i32_76 : i32
    %330 = tpu.assume_multiple %329, 8 : i32
    %331 = arith.index_cast %330 : i32 to index
    %c0_77 = arith.constant 0 : index
    %332 = vector.load %arg11[%331, %c0_77] : memref<64x128xf32, #tpu.memory_space<vmem>>, vector<8x128xf32>
    %333 = arith.addf %332, %306 : vector<8x128xf32>
    %334 = vector.extract_strided_slice %333 {offsets = [0, 0], sizes = [8, 96], strides = [1, 1]} : vector<8x128xf32> to vector<8x96xf32>
    %335 = arith.negf %334 : vector<8x96xf32>
    %336 = math.exp %335 : vector<8x96xf32>
    %cst_78 = arith.constant 1.000000e+00 : f32
    %337 = vector.broadcast %cst_78 : f32 to vector<8x96xf32>
    %338 = arith.addf %337, %336 : vector<8x96xf32>
    %339 = arith.divf %337, %338 : vector<8x96xf32>
    %340 = vector.extract_strided_slice %333 {offsets = [0, 96], sizes = [8, 32], strides = [1, 1]} : vector<8x128xf32> to vector<8x32xf32>
    %341 = math.tanh %340 : vector<8x32xf32>
    %342 = vector.extract_strided_slice %339 {offsets = [0, 0], sizes = [8, 32], strides = [1, 1]} : vector<8x96xf32> to vector<8x32xf32>
    %343 = vector.extract_strided_slice %339 {offsets = [0, 32], sizes = [8, 32], strides = [1, 1]} : vector<8x96xf32> to vector<8x32xf32>
    %344 = vector.extract_strided_slice %339 {offsets = [0, 64], sizes = [8, 32], strides = [1, 1]} : vector<8x96xf32> to vector<8x32xf32>
    %345 = arith.mulf %343, %303 : vector<8x32xf32>
    %346 = arith.mulf %342, %341 : vector<8x32xf32>
    %347 = arith.addf %345, %346 : vector<8x32xf32>
    %348 = math.tanh %347 : vector<8x32xf32>
    %349 = arith.mulf %344, %348 : vector<8x32xf32>
    %cst_79 = arith.constant dense<0.000000e+00> : vector<8x128xf32>
    %350 = tpu.matmul %349, %1, %cst_79 {dimension_numbers = #tpu.dot_dimension_numbers<[1], [0], [0], [1], [0, 0, 1, 1], [], []>} : vector<8x32xf32>, vector<32x128xf32>, vector<8x128xf32> -> vector<8x128xf32>
    %cst_80 = arith.constant dense<0.000000e+00> : vector<8x128xf32>
    %351 = tpu.matmul %349, %2, %cst_80 {dimension_numbers = #tpu.dot_dimension_numbers<[1], [0], [0], [1], [0, 0, 1, 1], [], []>} : vector<8x32xf32>, vector<32x128xf32>, vector<8x128xf32> -> vector<8x128xf32>
    %cst_81 = arith.constant dense<0.000000e+00> : vector<8x128xf32>
    %352 = tpu.matmul %326, %3, %cst_81 {dimension_numbers = #tpu.dot_dimension_numbers<[1], [0], [0], [1], [0, 0, 1, 1], [], []>} : vector<8x32xf32>, vector<32x128xf32>, vector<8x128xf32> -> vector<8x128xf32>
    %353 = arith.addf %351, %352 : vector<8x128xf32>
    %354 = arith.addf %353, %11 : vector<8x128xf32>
    %355 = vector.extract_strided_slice %354 {offsets = [0, 0], sizes = [8, 96], strides = [1, 1]} : vector<8x128xf32> to vector<8x96xf32>
    %356 = arith.negf %355 : vector<8x96xf32>
    %357 = math.exp %356 : vector<8x96xf32>
    %cst_82 = arith.constant 1.000000e+00 : f32
    %358 = vector.broadcast %cst_82 : f32 to vector<8x96xf32>
    %359 = arith.addf %358, %357 : vector<8x96xf32>
    %360 = arith.divf %358, %359 : vector<8x96xf32>
    %361 = vector.extract_strided_slice %354 {offsets = [0, 96], sizes = [8, 32], strides = [1, 1]} : vector<8x128xf32> to vector<8x32xf32>
    %362 = math.tanh %361 : vector<8x32xf32>
    %363 = vector.extract_strided_slice %360 {offsets = [0, 0], sizes = [8, 32], strides = [1, 1]} : vector<8x96xf32> to vector<8x32xf32>
    %364 = vector.extract_strided_slice %360 {offsets = [0, 32], sizes = [8, 32], strides = [1, 1]} : vector<8x96xf32> to vector<8x32xf32>
    %365 = vector.extract_strided_slice %360 {offsets = [0, 64], sizes = [8, 32], strides = [1, 1]} : vector<8x96xf32> to vector<8x32xf32>
    %366 = arith.mulf %364, %324 : vector<8x32xf32>
    %367 = arith.mulf %363, %362 : vector<8x32xf32>
    %368 = arith.addf %366, %367 : vector<8x32xf32>
    %369 = math.tanh %368 : vector<8x32xf32>
    %370 = arith.mulf %365, %369 : vector<8x32xf32>
    %371 = arith.index_cast %330 : i32 to index
    %c0_83 = arith.constant 0 : index
    %372 = vector.load %arg12[%371, %c0_83] : memref<88x32xf32, #tpu.memory_space<vmem>>, vector<8x32xf32>
    tpu.vector_store %arg12[%371, %c0_83], %370 {strides = array<i32>} : memref<88x32xf32, #tpu.memory_space<vmem>>, vector<8x32xf32>,
    %c8_i32_84 = arith.constant 8 : i32
    %cst_85 = arith.constant dense<0.000000e+00> : vector<8x4xf32>
    %373 = tpu.matmul %370, %6, %cst_85 {dimension_numbers = #tpu.dot_dimension_numbers<[1], [0], [0], [1], [0, 0, 1, 1], [], []>} : vector<8x32xf32>, vector<32x4xf32>, vector<8x4xf32> -> vector<8x4xf32>
    %374 = arith.addf %373, %13 : vector<8x4xf32>
    %c0_i32_86 = arith.constant 0 : i32
    %cst_87 = arith.constant dense<0.000000e+00> : vector<8x128xf32>
    %375 = tpu.matmul %374, %0, %cst_87 {dimension_numbers = #tpu.dot_dimension_numbers<[1], [0], [0], [1], [0, 0, 1, 1], [], []>} : vector<8x4xf32>, vector<4x128xf32>, vector<8x128xf32> -> vector<8x128xf32>
    %376 = arith.addf %350, %375 : vector<8x128xf32>
    %377 = arith.addf %376, %9 : vector<8x128xf32>
    %378 = vector.extract_strided_slice %377 {offsets = [0, 0], sizes = [8, 96], strides = [1, 1]} : vector<8x128xf32> to vector<8x96xf32>
    %379 = arith.negf %378 : vector<8x96xf32>
    %380 = math.exp %379 : vector<8x96xf32>
    %cst_88 = arith.constant 1.000000e+00 : f32
    %381 = vector.broadcast %cst_88 : f32 to vector<8x96xf32>
    %382 = arith.addf %381, %380 : vector<8x96xf32>
    %383 = arith.divf %381, %382 : vector<8x96xf32>
    %384 = vector.extract_strided_slice %377 {offsets = [0, 96], sizes = [8, 32], strides = [1, 1]} : vector<8x128xf32> to vector<8x32xf32>
    %385 = math.tanh %384 : vector<8x32xf32>
    %386 = vector.extract_strided_slice %383 {offsets = [0, 0], sizes = [8, 32], strides = [1, 1]} : vector<8x96xf32> to vector<8x32xf32>
    %387 = vector.extract_strided_slice %383 {offsets = [0, 32], sizes = [8, 32], strides = [1, 1]} : vector<8x96xf32> to vector<8x32xf32>
    %388 = vector.extract_strided_slice %383 {offsets = [0, 64], sizes = [8, 32], strides = [1, 1]} : vector<8x96xf32> to vector<8x32xf32>
    %389 = arith.mulf %387, %347 : vector<8x32xf32>
    %390 = arith.mulf %386, %385 : vector<8x32xf32>
    %391 = arith.addf %389, %390 : vector<8x32xf32>
    %392 = math.tanh %391 : vector<8x32xf32>
    %393 = arith.mulf %388, %392 : vector<8x32xf32>
    %cst_89 = arith.constant dense<0.000000e+00> : vector<8x128xf32>
    %394 = tpu.matmul %393, %1, %cst_89 {dimension_numbers = #tpu.dot_dimension_numbers<[1], [0], [0], [1], [0, 0, 1, 1], [], []>} : vector<8x32xf32>, vector<32x128xf32>, vector<8x128xf32> -> vector<8x128xf32>
    %cst_90 = arith.constant dense<0.000000e+00> : vector<8x128xf32>
    %395 = tpu.matmul %393, %2, %cst_90 {dimension_numbers = #tpu.dot_dimension_numbers<[1], [0], [0], [1], [0, 0, 1, 1], [], []>} : vector<8x32xf32>, vector<32x128xf32>, vector<8x128xf32> -> vector<8x128xf32>
    %cst_91 = arith.constant dense<0.000000e+00> : vector<8x128xf32>
    %396 = tpu.matmul %370, %3, %cst_91 {dimension_numbers = #tpu.dot_dimension_numbers<[1], [0], [0], [1], [0, 0, 1, 1], [], []>} : vector<8x32xf32>, vector<32x128xf32>, vector<8x128xf32> -> vector<8x128xf32>
    %397 = arith.addf %395, %396 : vector<8x128xf32>
    %398 = arith.addf %397, %11 : vector<8x128xf32>
    %399 = vector.extract_strided_slice %398 {offsets = [0, 0], sizes = [8, 96], strides = [1, 1]} : vector<8x128xf32> to vector<8x96xf32>
    %400 = arith.negf %399 : vector<8x96xf32>
    %401 = math.exp %400 : vector<8x96xf32>
    %cst_92 = arith.constant 1.000000e+00 : f32
    %402 = vector.broadcast %cst_92 : f32 to vector<8x96xf32>
    %403 = arith.addf %402, %401 : vector<8x96xf32>
    %404 = arith.divf %402, %403 : vector<8x96xf32>
    %405 = vector.extract_strided_slice %398 {offsets = [0, 96], sizes = [8, 32], strides = [1, 1]} : vector<8x128xf32> to vector<8x32xf32>
    %406 = math.tanh %405 : vector<8x32xf32>
    %407 = vector.extract_strided_slice %404 {offsets = [0, 0], sizes = [8, 32], strides = [1, 1]} : vector<8x96xf32> to vector<8x32xf32>
    %408 = vector.extract_strided_slice %404 {offsets = [0, 32], sizes = [8, 32], strides = [1, 1]} : vector<8x96xf32> to vector<8x32xf32>
    %409 = vector.extract_strided_slice %404 {offsets = [0, 64], sizes = [8, 32], strides = [1, 1]} : vector<8x96xf32> to vector<8x32xf32>
    %410 = arith.mulf %408, %368 : vector<8x32xf32>
    %411 = arith.mulf %407, %406 : vector<8x32xf32>
    %412 = arith.addf %410, %411 : vector<8x32xf32>
    %413 = math.tanh %412 : vector<8x32xf32>
    %414 = arith.mulf %409, %413 : vector<8x32xf32>
    %c8_i32_93 = arith.constant 8 : i32
    %415 = arith.addi %c8_i32_93, %c0_i32_86 : i32
    %c8_i32_94 = arith.constant 8 : i32
    %416 = arith.muli %415, %c8_i32_94 : i32
    %417 = tpu.assume_multiple %416, 8 : i32
    %418 = arith.index_cast %417 : i32 to index
    %c0_95 = arith.constant 0 : index
    %419 = vector.load %arg12[%418, %c0_95] : memref<88x32xf32, #tpu.memory_space<vmem>>, vector<8x32xf32>
    tpu.vector_store %arg12[%418, %c0_95], %414 {strides = array<i32>} : memref<88x32xf32, #tpu.memory_space<vmem>>, vector<8x32xf32>,
    %cst_96 = arith.constant dense<0.000000e+00> : vector<8x4xf32>
    %420 = tpu.matmul %414, %6, %cst_96 {dimension_numbers = #tpu.dot_dimension_numbers<[1], [0], [0], [1], [0, 0, 1, 1], [], []>} : vector<8x32xf32>, vector<32x4xf32>, vector<8x4xf32> -> vector<8x4xf32>
    %421 = arith.addf %420, %13 : vector<8x4xf32>
    %c1_i32_97 = arith.constant 1 : i32
    %cst_98 = arith.constant dense<0.000000e+00> : vector<8x128xf32>
    %422 = tpu.matmul %421, %0, %cst_98 {dimension_numbers = #tpu.dot_dimension_numbers<[1], [0], [0], [1], [0, 0, 1, 1], [], []>} : vector<8x4xf32>, vector<4x128xf32>, vector<8x128xf32> -> vector<8x128xf32>
    %423 = arith.addf %394, %422 : vector<8x128xf32>
    %424 = arith.addf %423, %9 : vector<8x128xf32>
    %425 = vector.extract_strided_slice %424 {offsets = [0, 0], sizes = [8, 96], strides = [1, 1]} : vector<8x128xf32> to vector<8x96xf32>
    %426 = arith.negf %425 : vector<8x96xf32>
    %427 = math.exp %426 : vector<8x96xf32>
    %cst_99 = arith.constant 1.000000e+00 : f32
    %428 = vector.broadcast %cst_99 : f32 to vector<8x96xf32>
    %429 = arith.addf %428, %427 : vector<8x96xf32>
    %430 = arith.divf %428, %429 : vector<8x96xf32>
    %431 = vector.extract_strided_slice %424 {offsets = [0, 96], sizes = [8, 32], strides = [1, 1]} : vector<8x128xf32> to vector<8x32xf32>
    %432 = math.tanh %431 : vector<8x32xf32>
    %433 = vector.extract_strided_slice %430 {offsets = [0, 0], sizes = [8, 32], strides = [1, 1]} : vector<8x96xf32> to vector<8x32xf32>
    %434 = vector.extract_strided_slice %430 {offsets = [0, 32], sizes = [8, 32], strides = [1, 1]} : vector<8x96xf32> to vector<8x32xf32>
    %435 = vector.extract_strided_slice %430 {offsets = [0, 64], sizes = [8, 32], strides = [1, 1]} : vector<8x96xf32> to vector<8x32xf32>
    %436 = arith.mulf %434, %391 : vector<8x32xf32>
    %437 = arith.mulf %433, %432 : vector<8x32xf32>
    %438 = arith.addf %436, %437 : vector<8x32xf32>
    %439 = math.tanh %438 : vector<8x32xf32>
    %440 = arith.mulf %435, %439 : vector<8x32xf32>
    %cst_100 = arith.constant dense<0.000000e+00> : vector<8x128xf32>
    %441 = tpu.matmul %440, %1, %cst_100 {dimension_numbers = #tpu.dot_dimension_numbers<[1], [0], [0], [1], [0, 0, 1, 1], [], []>} : vector<8x32xf32>, vector<32x128xf32>, vector<8x128xf32> -> vector<8x128xf32>
    %cst_101 = arith.constant dense<0.000000e+00> : vector<8x128xf32>
    %442 = tpu.matmul %440, %2, %cst_101 {dimension_numbers = #tpu.dot_dimension_numbers<[1], [0], [0], [1], [0, 0, 1, 1], [], []>} : vector<8x32xf32>, vector<32x128xf32>, vector<8x128xf32> -> vector<8x128xf32>
    %cst_102 = arith.constant dense<0.000000e+00> : vector<8x128xf32>
    %443 = tpu.matmul %414, %3, %cst_102 {dimension_numbers = #tpu.dot_dimension_numbers<[1], [0], [0], [1], [0, 0, 1, 1], [], []>} : vector<8x32xf32>, vector<32x128xf32>, vector<8x128xf32> -> vector<8x128xf32>
    %444 = arith.addf %442, %443 : vector<8x128xf32>
    %445 = arith.addf %444, %11 : vector<8x128xf32>
    %446 = vector.extract_strided_slice %445 {offsets = [0, 0], sizes = [8, 96], strides = [1, 1]} : vector<8x128xf32> to vector<8x96xf32>
    %447 = arith.negf %446 : vector<8x96xf32>
    %448 = math.exp %447 : vector<8x96xf32>
    %cst_103 = arith.constant 1.000000e+00 : f32
    %449 = vector.broadcast %cst_103 : f32 to vector<8x96xf32>
    %450 = arith.addf %449, %448 : vector<8x96xf32>
    %451 = arith.divf %449, %450 : vector<8x96xf32>
    %452 = vector.extract_strided_slice %445 {offsets = [0, 96], sizes = [8, 32], strides = [1, 1]} : vector<8x128xf32> to vector<8x32xf32>
    %453 = math.tanh %452 : vector<8x32xf32>
    %454 = vector.extract_strided_slice %451 {offsets = [0, 0], sizes = [8, 32], strides = [1, 1]} : vector<8x96xf32> to vector<8x32xf32>
    %455 = vector.extract_strided_slice %451 {offsets = [0, 32], sizes = [8, 32], strides = [1, 1]} : vector<8x96xf32> to vector<8x32xf32>
    %456 = vector.extract_strided_slice %451 {offsets = [0, 64], sizes = [8, 32], strides = [1, 1]} : vector<8x96xf32> to vector<8x32xf32>
    %457 = arith.mulf %455, %412 : vector<8x32xf32>
    %458 = arith.mulf %454, %453 : vector<8x32xf32>
    %459 = arith.addf %457, %458 : vector<8x32xf32>
    %460 = math.tanh %459 : vector<8x32xf32>
    %461 = arith.mulf %456, %460 : vector<8x32xf32>
    %c8_i32_104 = arith.constant 8 : i32
    %462 = arith.addi %c8_i32_104, %c1_i32_97 : i32
    %c8_i32_105 = arith.constant 8 : i32
    %463 = arith.muli %462, %c8_i32_105 : i32
    %464 = tpu.assume_multiple %463, 8 : i32
    %465 = arith.index_cast %464 : i32 to index
    %c0_106 = arith.constant 0 : index
    %466 = vector.load %arg12[%465, %c0_106] : memref<88x32xf32, #tpu.memory_space<vmem>>, vector<8x32xf32>
    tpu.vector_store %arg12[%465, %c0_106], %461 {strides = array<i32>} : memref<88x32xf32, #tpu.memory_space<vmem>>, vector<8x32xf32>,
    %cst_107 = arith.constant dense<0.000000e+00> : vector<8x4xf32>
    %467 = tpu.matmul %461, %6, %cst_107 {dimension_numbers = #tpu.dot_dimension_numbers<[1], [0], [0], [1], [0, 0, 1, 1], [], []>} : vector<8x32xf32>, vector<32x4xf32>, vector<8x4xf32> -> vector<8x4xf32>
    %468 = arith.addf %467, %13 : vector<8x4xf32>
    %c2_i32_108 = arith.constant 2 : i32
    %cst_109 = arith.constant dense<0.000000e+00> : vector<8x128xf32>
    %469 = tpu.matmul %468, %0, %cst_109 {dimension_numbers = #tpu.dot_dimension_numbers<[1], [0], [0], [1], [0, 0, 1, 1], [], []>} : vector<8x4xf32>, vector<4x128xf32>, vector<8x128xf32> -> vector<8x128xf32>
    %470 = arith.addf %441, %469 : vector<8x128xf32>
    %471 = arith.addf %470, %9 : vector<8x128xf32>
    %472 = vector.extract_strided_slice %471 {offsets = [0, 0], sizes = [8, 96], strides = [1, 1]} : vector<8x128xf32> to vector<8x96xf32>
    %473 = arith.negf %472 : vector<8x96xf32>
    %474 = math.exp %473 : vector<8x96xf32>
    %cst_110 = arith.constant 1.000000e+00 : f32
    %475 = vector.broadcast %cst_110 : f32 to vector<8x96xf32>
    %476 = arith.addf %475, %474 : vector<8x96xf32>
    %477 = arith.divf %475, %476 : vector<8x96xf32>
    %478 = vector.extract_strided_slice %471 {offsets = [0, 96], sizes = [8, 32], strides = [1, 1]} : vector<8x128xf32> to vector<8x32xf32>
    %479 = math.tanh %478 : vector<8x32xf32>
    %480 = vector.extract_strided_slice %477 {offsets = [0, 0], sizes = [8, 32], strides = [1, 1]} : vector<8x96xf32> to vector<8x32xf32>
    %481 = vector.extract_strided_slice %477 {offsets = [0, 32], sizes = [8, 32], strides = [1, 1]} : vector<8x96xf32> to vector<8x32xf32>
    %482 = vector.extract_strided_slice %477 {offsets = [0, 64], sizes = [8, 32], strides = [1, 1]} : vector<8x96xf32> to vector<8x32xf32>
    %483 = arith.mulf %481, %438 : vector<8x32xf32>
    %484 = arith.mulf %480, %479 : vector<8x32xf32>
    %485 = arith.addf %483, %484 : vector<8x32xf32>
    %486 = math.tanh %485 : vector<8x32xf32>
    %487 = arith.mulf %482, %486 : vector<8x32xf32>
    %cst_111 = arith.constant dense<0.000000e+00> : vector<8x128xf32>
    %488 = tpu.matmul %487, %1, %cst_111 {dimension_numbers = #tpu.dot_dimension_numbers<[1], [0], [0], [1], [0, 0, 1, 1], [], []>} : vector<8x32xf32>, vector<32x128xf32>, vector<8x128xf32> -> vector<8x128xf32>
    %cst_112 = arith.constant dense<0.000000e+00> : vector<8x128xf32>
    %489 = tpu.matmul %487, %2, %cst_112 {dimension_numbers = #tpu.dot_dimension_numbers<[1], [0], [0], [1], [0, 0, 1, 1], [], []>} : vector<8x32xf32>, vector<32x128xf32>, vector<8x128xf32> -> vector<8x128xf32>
    %cst_113 = arith.constant dense<0.000000e+00> : vector<8x128xf32>
    %490 = tpu.matmul %461, %3, %cst_113 {dimension_numbers = #tpu.dot_dimension_numbers<[1], [0], [0], [1], [0, 0, 1, 1], [], []>} : vector<8x32xf32>, vector<32x128xf32>, vector<8x128xf32> -> vector<8x128xf32>
    %491 = arith.addf %489, %490 : vector<8x128xf32>
    %492 = arith.addf %491, %11 : vector<8x128xf32>
    %493 = vector.extract_strided_slice %492 {offsets = [0, 0], sizes = [8, 96], strides = [1, 1]} : vector<8x128xf32> to vector<8x96xf32>
    %494 = arith.negf %493 : vector<8x96xf32>
    %495 = math.exp %494 : vector<8x96xf32>
    %cst_114 = arith.constant 1.000000e+00 : f32
    %496 = vector.broadcast %cst_114 : f32 to vector<8x96xf32>
    %497 = arith.addf %496, %495 : vector<8x96xf32>
    %498 = arith.divf %496, %497 : vector<8x96xf32>
    %499 = vector.extract_strided_slice %492 {offsets = [0, 96], sizes = [8, 32], strides = [1, 1]} : vector<8x128xf32> to vector<8x32xf32>
    %500 = math.tanh %499 : vector<8x32xf32>
    %501 = vector.extract_strided_slice %498 {offsets = [0, 0], sizes = [8, 32], strides = [1, 1]} : vector<8x96xf32> to vector<8x32xf32>
    %502 = vector.extract_strided_slice %498 {offsets = [0, 32], sizes = [8, 32], strides = [1, 1]} : vector<8x96xf32> to vector<8x32xf32>
    %503 = vector.extract_strided_slice %498 {offsets = [0, 64], sizes = [8, 32], strides = [1, 1]} : vector<8x96xf32> to vector<8x32xf32>
    %504 = arith.mulf %502, %459 : vector<8x32xf32>
    %505 = arith.mulf %501, %500 : vector<8x32xf32>
    %506 = arith.addf %504, %505 : vector<8x32xf32>
    %507 = math.tanh %506 : vector<8x32xf32>
    %508 = arith.mulf %503, %507 : vector<8x32xf32>
    %c8_i32_115 = arith.constant 8 : i32
    %509 = arith.addi %c8_i32_115, %c2_i32_108 : i32
    %c8_i32_116 = arith.constant 8 : i32
    %510 = arith.muli %509, %c8_i32_116 : i32
    %511 = tpu.assume_multiple %510, 8 : i32
    %512 = arith.index_cast %511 : i32 to index
    %c0_117 = arith.constant 0 : index
    %513 = vector.load %arg12[%512, %c0_117] : memref<88x32xf32, #tpu.memory_space<vmem>>, vector<8x32xf32>
    tpu.vector_store %arg12[%512, %c0_117], %508 {strides = array<i32>} : memref<88x32xf32, #tpu.memory_space<vmem>>, vector<8x32xf32>,
    %cst_118 = arith.constant dense<0.000000e+00> : vector<8x4xf32>
    %514 = tpu.matmul %508, %6, %cst_118 {dimension_numbers = #tpu.dot_dimension_numbers<[1], [0], [0], [1], [0, 0, 1, 1], [], []>} : vector<8x32xf32>, vector<32x4xf32>, vector<8x4xf32> -> vector<8x4xf32>
    %515 = arith.addf %514, %13 : vector<8x4xf32>
    %c3_i32_119 = arith.constant 3 : i32
    %c0_120 = arith.constant 0 : index
    %c0_121 = arith.constant 0 : index
    %516 = vector.load %arg12[%c0_120, %c0_121] : memref<88x32xf32, #tpu.memory_space<vmem>>, vector<88x32xf32>
    %cst_122 = arith.constant dense<0.000000e+00> : vector<88x4xf32>
    %517 = tpu.matmul %516, %6, %cst_122 {dimension_numbers = #tpu.dot_dimension_numbers<[1], [0], [0], [1], [0, 0, 1, 1], [], []>} : vector<88x32xf32>, vector<32x4xf32>, vector<88x4xf32> -> vector<88x4xf32>
    %518 = vector.broadcast %7 : vector<1x4xf32> to vector<88x4xf32>
    %519 = arith.addf %517, %518 : vector<88x4xf32>
    %c0_123 = arith.constant 0 : index
    %c0_124 = arith.constant 0 : index
    %520 = vector.load %arg10[%c0_123, %c0_124] : memref<88x4xf32, #tpu.memory_space<vmem>>, vector<88x4xf32>
    tpu.vector_store %arg10[%c0_123, %c0_124], %519 {strides = array<i32>} : memref<88x4xf32, #tpu.memory_space<vmem>>, vector<88x4xf32>,
    return
  }
  func.func @transform_0(%arg0: i32) -> (i32, i32) {
    %c0_i32 = arith.constant 0 : i32
    %c0_i32_0 = arith.constant 0 : i32
    %c0_i32_1 = arith.constant 0 : i32
    return %c0_i32, %c0_i32_0 : i32, i32
  }
  func.func @transform_1(%arg0: i32) -> (i32, i32) {
    %c0_i32 = arith.constant 0 : i32
    %c0_i32_0 = arith.constant 0 : i32
    %c0_i32_1 = arith.constant 0 : i32
    return %c0_i32, %c0_i32_0 : i32, i32
  }
  func.func @transform_2(%arg0: i32) -> (i32, i32) {
    %c0_i32 = arith.constant 0 : i32
    %c0_i32_0 = arith.constant 0 : i32
    %c0_i32_1 = arith.constant 0 : i32
    return %c0_i32, %c0_i32_0 : i32, i32
  }
  func.func @transform_3(%arg0: i32) -> (i32, i32) {
    %c0_i32 = arith.constant 0 : i32
    %c0_i32_0 = arith.constant 0 : i32
    %c0_i32_1 = arith.constant 0 : i32
    return %c0_i32, %c0_i32_0 : i32, i32
  }
  func.func @transform_4(%arg0: i32) -> (i32, i32) {
    %c0_i32 = arith.constant 0 : i32
    %c0_i32_0 = arith.constant 0 : i32
    %c0_i32_1 = arith.constant 0 : i32
    return %c0_i32, %c0_i32_0 : i32, i32
  }
  func.func @transform_5(%arg0: i32) -> (i32, i32) {
    %c0_i32 = arith.constant 0 : i32
    %c0_i32_0 = arith.constant 0 : i32
    %c0_i32_1 = arith.constant 0 : i32
    return %c0_i32, %c0_i32_0 : i32, i32
  }
  func.func @transform_6(%arg0: i32) -> (i32, i32) {
    %c0_i32 = arith.constant 0 : i32
    %c0_i32_0 = arith.constant 0 : i32
    %c0_i32_1 = arith.constant 0 : i32
    return %c0_i32, %c0_i32_0 : i32, i32
  }
  func.func @transform_7(%arg0: i32) -> (i32, i32) {
    %c0_i32 = arith.constant 0 : i32
    %c0_i32_0 = arith.constant 0 : i32
    %c0_i32_1 = arith.constant 0 : i32
    return %c0_i32, %c0_i32_0 : i32, i32
  }
  func.func @transform_8(%arg0: i32) -> (i32, i32) {
    %c0_i32 = arith.constant 0 : i32
    %c0_i32_0 = arith.constant 0 : i32
    %c0_i32_1 = arith.constant 0 : i32
    return %c0_i32, %c0_i32_0 : i32, i32
  }
  func.func @transform_9(%arg0: i32) -> (i32, i32) {
    %c0_i32 = arith.constant 0 : i32
    %c0_i32_0 = arith.constant 0 : i32
    %c0_i32_1 = arith.constant 0 : i32
    return %c0_i32, %c0_i32_0 : i32, i32
  }
}

</mosaic_0001>

<llo_original>
// kernel: tpu_custom_call.1
$region0: #{tpu_custom_call.1}
  #allocation0 [shape = 'u32[]', space=smem, size = 0x4, offset = 0x4, fixed_abs, tag = 'smem constant byte address 0x4 - core index']
  #allocation1 [shape = 'u32[72,128]{1,0:T(1,128)}', space=vmem, size = 0x9000, scoped, tag = 'internal scratch']
  #allocation2 [shape = 'f32[64,128]{1,0:T(8,128)}', space=vmem, size = 0x8000, scoped, tag = 'scratch operand']
  #allocation3 [shape = 'f32[88,32]{1,0:T(8,128)}', space=vmem, size = 0xb000, scoped, tag = 'scratch operand']
  %s0 = inlined_call_operand.vmem [shape: f32[64,4], index: 0, kind: input, shape index: {}]
  %s1 = inlined_call_operand.vmem [shape: f32[4,128], index: 1, kind: input, shape index: {}]
  %s2 = inlined_call_operand.vmem [shape: f32[32,128], index: 2, kind: input, shape index: {}]
  %s3 = inlined_call_operand.vmem [shape: f32[32,128], index: 3, kind: input, shape index: {}]
  %s4 = inlined_call_operand.vmem [shape: f32[32,128], index: 4, kind: input, shape index: {}]
  %s5 = inlined_call_operand.vmem [shape: f32[1,128], index: 5, kind: input, shape index: {}]
  %s6 = inlined_call_operand.vmem [shape: f32[1,128], index: 6, kind: input, shape index: {}]
  %s7 = inlined_call_operand.vmem [shape: f32[32,4], index: 7, kind: input, shape index: {}]
  %s8 = inlined_call_operand.vmem [shape: f32[1,4], index: 8, kind: input, shape index: {}]
  %s9 = inlined_call_operand.vmem [shape: f32[88,4], index: 9, kind: output, shape index: {}]
  %s10 = sld [smem:[#allocation0]]
  $region46: #{tpu_custom_call.1} parent=0
    _
  %s12 = ssub.s32 1, %s10
  %s13 = scalar_select 0, %s12, %s10
  // Predicated region
  $region2: #{tpu_custom_call.1} parent=0 // pred_check
    _
  $region3: #{tpu_custom_call.1} parent=0 // pred_check_branch
    %15 = sbr.rel (0) target = $region5
  $region4: #{tpu_custom_call.1} parent=0 // pred_region
    _
  $region5: #{tpu_custom_call.1} parent=0 // pred_fallthru
    _
  // Predicated region
  $region6: #{tpu_custom_call.1} parent=0 // pred_check
    _
  $region7: #{tpu_custom_call.1} parent=0 // pred_check_branch
    %17 = sbr.rel (0) target = $region9
  $region8: #{tpu_custom_call.1} parent=0 // pred_region
    _
  $region9: #{tpu_custom_call.1} parent=0 // pred_fallthru
    _
  // Predicated region
  $region10: #{tpu_custom_call.1} parent=0 // pred_check
    _
  $region11: #{tpu_custom_call.1} parent=0 // pred_check_branch
    %19 = sbr.rel (0) target = $region13
  $region12: #{tpu_custom_call.1} parent=0 // pred_region
    _
  $region13: #{tpu_custom_call.1} parent=0 // pred_fallthru
    _
  // Predicated region
  $region14: #{tpu_custom_call.1} parent=0 // pred_check
    _
  $region15: #{tpu_custom_call.1} parent=0 // pred_check_branch
    %21 = sbr.rel (0) target = $region17
  $region16: #{tpu_custom_call.1} parent=0 // pred_region
    _
  $region17: #{tpu_custom_call.1} parent=0 // pred_fallthru
    _
  // Predicated region
  $region18: #{tpu_custom_call.1} parent=0 // pred_check
    _
  $region19: #{tpu_custom_call.1} parent=0 // pred_check_branch
    %23 = sbr.rel (0) target = $region21
  $region20: #{tpu_custom_call.1} parent=0 // pred_region
    _
  $region21: #{tpu_custom_call.1} parent=0 // pred_fallthru
    _
  // Predicated region
  $region22: #{tpu_custom_call.1} parent=0 // pred_check
    _
  $region23: #{tpu_custom_call.1} parent=0 // pred_check_branch
    %25 = sbr.rel (0) target = $region25
  $region24: #{tpu_custom_call.1} parent=0 // pred_region
    _
  $region25: #{tpu_custom_call.1} parent=0 // pred_fallthru
    _
  // Predicated region
  $region26: #{tpu_custom_call.1} parent=0 // pred_check
    _
  $region27: #{tpu_custom_call.1} parent=0 // pred_check_branch
    %27 = sbr.rel (0) target = $region29
  $region28: #{tpu_custom_call.1} parent=0 // pred_region
    _
  $region29: #{tpu_custom_call.1} parent=0 // pred_fallthru
    _
  // Predicated region
  $region30: #{tpu_custom_call.1} parent=0 // pred_check
    _
  $region31: #{tpu_custom_call.1} parent=0 // pred_check_branch
    %29 = sbr.rel (0) target = $region33
  $region32: #{tpu_custom_call.1} parent=0 // pred_region
    _
  $region33: #{tpu_custom_call.1} parent=0 // pred_fallthru
    _
  // Predicated region
  $region34: #{tpu_custom_call.1} parent=0 // pred_check
    _
  $region35: #{tpu_custom_call.1} parent=0 // pred_check_branch
    %31 = sbr.rel (0) target = $region37
  $region36: #{tpu_custom_call.1} parent=0 // pred_region
    _
  $region37: #{tpu_custom_call.1} parent=0 // pred_fallthru
    _
  %v32 = vld [vmem:[%s1] sm:$0xf]
  %v33 = vld [vmem:[%s2] sm:$0xff]
  %v34 = vld [vmem:[%s2 + $0x8] sm:$0xff]
  %v35 = vld [vmem:[%s2 + $0x10] sm:$0xff]
  %v36 = vld [vmem:[%s2 + $0x18] sm:$0xff]
  %v37 = vld [vmem:[%s3] sm:$0xff]
  %v38 = vld [vmem:[%s3 + $0x8] sm:$0xff]
  %v39 = vld [vmem:[%s3 + $0x10] sm:$0xff]
  %v40 = vld [vmem:[%s3 + $0x18] sm:$0xff]
  %v41 = vld [vmem:[%s4] sm:$0xff]
  %v42 = vld [vmem:[%s4 + $0x8] sm:$0xff]
  %v43 = vld [vmem:[%s4 + $0x10] sm:$0xff]
  %v44 = vld [vmem:[%s4 + $0x18] sm:$0xff]
  %v45 = vld [vmem:[%s5] sm:$0x1]
  %v46 = vld [vmem:[%s6] sm:$0x1]
  %v47 = vld [vmem:[%s7] sm:$0xff]
  %v48 = vld [vmem:[%s7 + $0x8] sm:$0xff]
  %v49 = vld [vmem:[%s7 + $0x10] sm:$0xff]
  %v50 = vld [vmem:[%s7 + $0x18] sm:$0xff]
  %v51 = vld [vmem:[%s8] sm:$0x1]
  %v53 = vperm.slane %v45, 0
  %v56 = vperm.slane %v46, 0
  %v59 = vperm.slane %v51, 0
  %v61 = vld [vmem:[%s0] sm:$0xff]
  %v62 = vld [vmem:[%s0 + $0x8] sm:$0xff]
  %v63 = vld [vmem:[%s0 + $0x10] sm:$0xff]
  %v64 = vld [vmem:[%s0 + $0x18] sm:$0xff]
  %v65 = vld [vmem:[%s0 + $0x20] sm:$0xff]
  %v66 = vld [vmem:[%s0 + $0x28] sm:$0xff]
  %v67 = vld [vmem:[%s0 + $0x30] sm:$0xff]
  %v68 = vld [vmem:[%s0 + $0x38] sm:$0xff]
  %vm69 = vcmask 31744
  %v71 = vsel %vm69, %v61, 0
  %v74 = vsel %vm69, %v62, 0
  %v77 = vsel %vm69, %v63, 0
  %v80 = vsel %vm69, %v64, 0
  %v83 = vsel %vm69, %v65, 0
  %v86 = vsel %vm69, %v66, 0
  %v89 = vsel %vm69, %v67, 0
  %v92 = vsel %vm69, %v68, 0
  %vm94 = vcmask 1043456
  %v96 = vsel %vm94, %v32, 0
  %98 = vmatpush.msra.mxu0 0.0
  %99 = vmatpush.msra.mxu0 0.0
  %100 = vmatpush.msra.mxu0 0.0
  %101 = vmatpush.msra.mxu0 0.0
  %102 = vmatpush.msra.mxu0 0.0
  %103 = vmatpush.msra.mxu0 0.0
  %104 = vmatpush.msra.mxu0 0.0
  %105 = vmatpush.msra.mxu0 0.0
  %106 = vmatpush.msra.mxu0 0.0
  %107 = vmatpush.msra.mxu0 0.0
  %108 = vmatpush.msra.mxu0 0.0
  %109 = vmatpush.msra.mxu0 0.0
  %110 = vmatpush.msra.mxu0 0.0
  %111 = vmatpush.msra.mxu0 0.0
  %112 = vmatpush.msra.mxu0 0.0
  %113 = vmatpush.msra.mxu0 %v96
  %114 = vmatmul.f32.gmra.mxu0 %v71
  %v115 = vpop.f32.mrf.mxu0
  %v116 = vadd.f32 %v53, %v115
  %117 = vmatmul.f32.gmra.mxu0 %v74
  %v118 = vpop.f32.mrf.mxu0
  %v119 = vadd.f32 %v53, %v118
  %120 = vmatmul.f32.gmra.mxu0 %v77
  %v121 = vpop.f32.mrf.mxu0
  %v122 = vadd.f32 %v53, %v121
  %123 = vmatmul.f32.gmra.mxu0 %v80
  %v124 = vpop.f32.mrf.mxu0
  %v125 = vadd.f32 %v53, %v124
  %126 = vmatmul.f32.gmra.mxu0 %v83
  %v127 = vpop.f32.mrf.mxu0
  %v128 = vadd.f32 %v53, %v127
  %129 = vmatmul.f32.gmra.mxu0 %v86
  %v130 = vpop.f32.mrf.mxu0
  %v131 = vadd.f32 %v53, %v130
  %132 = vmatmul.f32.gmra.mxu0 %v89
  %v133 = vpop.f32.mrf.mxu0
  %v134 = vadd.f32 %v53, %v133
  %135 = vmatmul.f32.gmra.mxu0 %v92
  %v136 = vpop.f32.mrf.mxu0
  %v137 = vadd.f32 %v53, %v136
  %138 = vdwg.mxu0
  %139 = vst [vmem:[#allocation2] sm:$0xff] %v116
  %140 = vst [vmem:[#allocation2 + $0x8] sm:$0xff] %v119
  %141 = vst [vmem:[#allocation2 + $0x10] sm:$0xff] %v122
  %142 = vst [vmem:[#allocation2 + $0x18] sm:$0xff] %v125
  %143 = vst [vmem:[#allocation2 + $0x20] sm:$0xff] %v128
  %144 = vst [vmem:[#allocation2 + $0x28] sm:$0xff] %v131
  %145 = vst [vmem:[#allocation2 + $0x30] sm:$0xff] %v134
  %146 = vst [vmem:[#allocation2 + $0x38] sm:$0xff] %v137
  %v147 = vld [vmem:[#allocation2] sm:$0xff]
  %v148 = vadd.f32 %v147, 0.0
  %v149 = vxor.u32 %v148, 2147483648
  %v150 = vmul.f32 %v149, 1.442695
  %v151 = vpow.pop %v150
  %v152 = vadd.f32 %v151, 1.0
  %v153 = vrcp.pop %v152
  %v154 = vmul.f32 %v152, %v153
  %v155 = vsub.f32 1.0, %v154
  %v156 = vmul.f32 %v153, %v155
  %v157 = vadd.f32 %v153, %v156
  %vm158 = vweird.f32 %v152
  %vm159 = vweird.f32 %v153
  %vm160 = vmor %vm158, %vm159
  %v161 = vsel %vm160, %v153, %v157
  %v162 = vand.u32 2147483647, %v152
  %vm163 = vcmp.eq.f32.partialorder %v162, 8.507059e+37
  %v164 = vand.u32 %v152, 2147483648
  %v165 = vor.u32 1.1754944e-38, %v164
  %v166 = vsel %vm163, %v165, %v161
  %v167 = vmul.f32 1.0, %v166
  %v168 = vtanh.pop %v148
  %v169 = vmul.f32 %v167, 0.0
  %171 = vrot.lane.b32.xlu0 %v168, 32
  %v172 = vpop.permute.xlu0 %171
  %v174 = vmul.f32 %v167, %v172
  %176 = vrot.lane.b32.xlu0 %v174, 32
  %v177 = vpop.permute.xlu0 %176
  %v179 = vadd.f32 %v169, %v177
  %v180 = vtanh.pop %v179
  %182 = vrot.lane.b32.xlu0 %v180, 32
  %v183 = vpop.permute.xlu0 %182
  %v185 = vmul.f32 %v167, %v183
  %187 = vrot.lane.b32.xlu0 %v185, 64
  %v188 = vpop.permute.xlu0 %187
  %vm189 = vcmask 261120
  %v190 = vsel %vm189, %v188, 0
  %192 = vmatpush.msra.mxu0 0.0
  %193 = vmatpush.msra.mxu0 0.0
  %194 = vmatpush.msra.mxu0 0.0
  %195 = vmatpush.msra.mxu0 0.0
  %196 = vmatpush.msra.mxu0 0.0
  %197 = vmatpush.msra.mxu0 0.0
  %198 = vmatpush.msra.mxu0 0.0
  %199 = vmatpush.msra.mxu0 0.0
  %200 = vmatpush.msra.mxu0 0.0
  %201 = vmatpush.msra.mxu0 0.0
  %202 = vmatpush.msra.mxu0 0.0
  %203 = vmatpush.msra.mxu0 0.0
  %204 = vmatpush.msra.mxu0 %v36
  %205 = vmatpush.msra.mxu0 %v35
  %206 = vmatpush.msra.mxu0 %v34
  %207 = vmatpush.msra.mxu0 %v33
  %208 = vmatmul.f32.gmra.mxu0 %v190
  %v209 = vpop.f32.mrf.mxu0
  %v210 = vadd.f32 0.0, %v209
  %211 = vdwg.mxu0
  %v213 = vsel %vm189, 0.0, 0
  %215 = vmatpush.msra.mxu0 0.0
  %216 = vmatpush.msra.mxu0 0.0
  %217 = vmatpush.msra.mxu0 0.0
  %218 = vmatpush.msra.mxu0 0.0
  %219 = vmatpush.msra.mxu0 0.0
  %220 = vmatpush.msra.mxu0 0.0
  %221 = vmatpush.msra.mxu0 0.0
  %222 = vmatpush.msra.mxu0 0.0
  %223 = vmatpush.msra.mxu0 0.0
  %224 = vmatpush.msra.mxu0 0.0
  %225 = vmatpush.msra.mxu0 0.0
  %226 = vmatpush.msra.mxu0 0.0
  %227 = vmatpush.msra.mxu0 %v44
  %228 = vmatpush.msra.mxu0 %v43
  %229 = vmatpush.msra.mxu0 %v42
  %230 = vmatpush.msra.mxu0 %v41
  %231 = vmatmul.f32.gmra.mxu0 %v213
  %v232 = vpop.f32.mrf.mxu0
  %v233 = vadd.f32 0.0, %v232
  %234 = vdwg.mxu0
  %235 = vmatpush.msra.mxu0 0.0
  %236 = vmatpush.msra.mxu0 0.0
  %237 = vmatpush.msra.mxu0 0.0
  %238 = vmatpush.msra.mxu0 0.0
  %239 = vmatpush.msra.mxu0 0.0
  %240 = vmatpush.msra.mxu0 0.0
  %241 = vmatpush.msra.mxu0 0.0
  %242 = vmatpush.msra.mxu0 0.0
  %243 = vmatpush.msra.mxu0 0.0
  %244 = vmatpush.msra.mxu0 0.0
  %245 = vmatpush.msra.mxu0 0.0
  %246 = vmatpush.msra.mxu0 0.0
  %247 = vmatpush.msra.mxu0 %v40
  %248 = vmatpush.msra.mxu0 %v39
  %249 = vmatpush.msra.mxu0 %v38
  %250 = vmatpush.msra.mxu0 %v37
  %251 = vmatmul.f32.gmra.mxu0 %v190
  %v252 = vpop.f32.mrf.mxu0
  %v253 = vadd.f32 %v233, %v252
  %254 = vdwg.mxu0
  %v255 = vadd.f32 %v253, %v56
  %v256 = vxor.u32 %v255, 2147483648
  %v257 = vmul.f32 %v256, 1.442695
  %v258 = vpow.pop %v257
  %v259 = vadd.f32 %v258, 1.0
  %v260 = vrcp.pop %v259
  %v261 = vmul.f32 %v259, %v260
  %v262 = vsub.f32 1.0, %v261
  %v263 = vmul.f32 %v260, %v262
  %v264 = vadd.f32 %v260, %v263
  %vm265 = vweird.f32 %v259
  %vm266 = vweird.f32 %v260
  %vm267 = vmor %vm265, %vm266
  %v268 = vsel %vm267, %v260, %v264
  %v269 = vand.u32 2147483647, %v259
  %vm270 = vcmp.eq.f32.partialorder %v269, 8.507059e+37
  %v271 = vand.u32 %v259, 2147483648
  %v272 = vor.u32 1.1754944e-38, %v271
  %v273 = vsel %vm270, %v272, %v268
  %v274 = vmul.f32 1.0, %v273
  %v275 = vtanh.pop %v255
  %v276 = vmul.f32 %v274, 0.0
  %278 = vrot.lane.b32.xlu0 %v275, 32
  %v279 = vpop.permute.xlu0 %278
  %v281 = vmul.f32 %v274, %v279
  %283 = vrot.lane.b32.xlu0 %v281, 32
  %v284 = vpop.permute.xlu0 %283
  %v286 = vadd.f32 %v276, %v284
  %v287 = vtanh.pop %v286
  %289 = vrot.lane.b32.xlu0 %v287, 32
  %v290 = vpop.permute.xlu0 %289
  %v292 = vmul.f32 %v274, %v290
  %294 = vrot.lane.b32.xlu0 %v292, 64
  %v295 = vpop.permute.xlu0 %294
  %297 = vst.msk [vmem:[#allocation3] sm:$0xff] %vm189, %v295
  %s298 = scalar_lea.vmem [#allocation2], 8
  %v299 = vld [vmem:[%s298] sm:$0xff]
  %v300 = vadd.f32 %v299, %v210
  %v301 = vxor.u32 %v300, 2147483648
  %v302 = vmul.f32 %v301, 1.442695
  %v303 = vpow.pop %v302
  %v304 = vadd.f32 %v303, 1.0
  %v305 = vrcp.pop %v304
  %v306 = vmul.f32 %v304, %v305
  %v307 = vsub.f32 1.0, %v306
  %v308 = vmul.f32 %v305, %v307
  %v309 = vadd.f32 %v305, %v308
  %vm310 = vweird.f32 %v304
  %vm311 = vweird.f32 %v305
  %vm312 = vmor %vm310, %vm311
  %v313 = vsel %vm312, %v305, %v309
  %v314 = vand.u32 2147483647, %v304
  %vm315 = vcmp.eq.f32.partialorder %v314, 8.507059e+37
  %v316 = vand.u32 %v304, 2147483648
  %v317 = vor.u32 1.1754944e-38, %v316
  %v318 = vsel %vm315, %v317, %v313
  %v319 = vmul.f32 1.0, %v318
  %v320 = vtanh.pop %v300
  %v321 = vmul.f32 %v319, %v179
  %323 = vrot.lane.b32.xlu0 %v320, 32
  %v324 = vpop.permute.xlu0 %323
  %v326 = vmul.f32 %v319, %v324
  %328 = vrot.lane.b32.xlu0 %v326, 32
  %v329 = vpop.permute.xlu0 %328
  %v331 = vadd.f32 %v321, %v329
  %v332 = vtanh.pop %v331
  %334 = vrot.lane.b32.xlu0 %v332, 32
  %v335 = vpop.permute.xlu0 %334
  %v337 = vmul.f32 %v319, %v335
  %339 = vrot.lane.b32.xlu0 %v337, 64
  %v340 = vpop.permute.xlu0 %339
  %v341 = vsel %vm189, %v340, 0
  %343 = vmatpush.msra.mxu0 0.0
  %344 = vmatpush.msra.mxu0 0.0
  %345 = vmatpush.msra.mxu0 0.0
  %346 = vmatpush.msra.mxu0 0.0
  %347 = vmatpush.msra.mxu0 0.0
  %348 = vmatpush.msra.mxu0 0.0
  %349 = vmatpush.msra.mxu0 0.0
  %350 = vmatpush.msra.mxu0 0.0
  %351 = vmatpush.msra.mxu0 0.0
  %352 = vmatpush.msra.mxu0 0.0
  %353 = vmatpush.msra.mxu0 0.0
  %354 = vmatpush.msra.mxu0 0.0
  %355 = vmatpush.msra.mxu0 %v36
  %356 = vmatpush.msra.mxu0 %v35
  %357 = vmatpush.msra.mxu0 %v34
  %358 = vmatpush.msra.mxu0 %v33
  %359 = vmatmul.f32.gmra.mxu0 %v341
  %v360 = vpop.f32.mrf.mxu0
  %v361 = vadd.f32 0.0, %v360
  %362 = vdwg.mxu0
  %v363 = vsel %vm189, %v295, 0
  %365 = vmatpush.msra.mxu0 0.0
  %366 = vmatpush.msra.mxu0 0.0
  %367 = vmatpush.msra.mxu0 0.0
  %368 = vmatpush.msra.mxu0 0.0
  %369 = vmatpush.msra.mxu0 0.0
  %370 = vmatpush.msra.mxu0 0.0
  %371 = vmatpush.msra.mxu0 0.0
  %372 = vmatpush.msra.mxu0 0.0
  %373 = vmatpush.msra.mxu0 0.0
  %374 = vmatpush.msra.mxu0 0.0
  %375 = vmatpush.msra.mxu0 0.0
  %376 = vmatpush.msra.mxu0 0.0
  %377 = vmatpush.msra.mxu0 %v44
  %378 = vmatpush.msra.mxu0 %v43
  %379 = vmatpush.msra.mxu0 %v42
  %380 = vmatpush.msra.mxu0 %v41
  %381 = vmatmul.f32.gmra.mxu0 %v363
  %v382 = vpop.f32.mrf.mxu0
  %v383 = vadd.f32 0.0, %v382
  %384 = vdwg.mxu0
  %385 = vmatpush.msra.mxu0 0.0
  %386 = vmatpush.msra.mxu0 0.0
  %387 = vmatpush.msra.mxu0 0.0
  %388 = vmatpush.msra.mxu0 0.0
  %389 = vmatpush.msra.mxu0 0.0
  %390 = vmatpush.msra.mxu0 0.0
  %391 = vmatpush.msra.mxu0 0.0
  %392 = vmatpush.msra.mxu0 0.0
  %393 = vmatpush.msra.mxu0 0.0
  %394 = vmatpush.msra.mxu0 0.0
  %395 = vmatpush.msra.mxu0 0.0
  %396 = vmatpush.msra.mxu0 0.0
  %397 = vmatpush.msra.mxu0 %v40
  %398 = vmatpush.msra.mxu0 %v39
  %399 = vmatpush.msra.mxu0 %v38
  %400 = vmatpush.msra.mxu0 %v37
  %401 = vmatmul.f32.gmra.mxu0 %v341
  %v402 = vpop.f32.mrf.mxu0
  %v403 = vadd.f32 %v383, %v402
  %404 = vdwg.mxu0
  %v405 = vadd.f32 %v403, %v56
  %v406 = vxor.u32 %v405, 2147483648
  %v407 = vmul.f32 %v406, 1.442695
  %v408 = vpow.pop %v407
  %v409 = vadd.f32 %v408, 1.0
  %v410 = vrcp.pop %v409
  %v411 = vmul.f32 %v409, %v410
  %v412 = vsub.f32 1.0, %v411
  %v413 = vmul.f32 %v410, %v412
  %v414 = vadd.f32 %v410, %v413
  %vm415 = vweird.f32 %v409
  %vm416 = vweird.f32 %v410
  %vm417 = vmor %vm415, %vm416
  %v418 = vsel %vm417, %v410, %v414
  %v419 = vand.u32 2147483647, %v409
  %vm420 = vcmp.eq.f32.partialorder %v419, 8.507059e+37
  %v421 = vand.u32 %v409, 2147483648
  %v422 = vor.u32 1.1754944e-38, %v421
  %v423 = vsel %vm420, %v422, %v418
  %v424 = vmul.f32 1.0, %v423
  %v425 = vtanh.pop %v405
  %v426 = vmul.f32 %v424, %v286
  %428 = vrot.lane.b32.xlu0 %v425, 32
  %v429 = vpop.permute.xlu0 %428
  %v431 = vmul.f32 %v424, %v429
  %433 = vrot.lane.b32.xlu0 %v431, 32
  %v434 = vpop.permute.xlu0 %433
  %v436 = vadd.f32 %v426, %v434
  %v437 = vtanh.pop %v436
  %439 = vrot.lane.b32.xlu0 %v437, 32
  %v440 = vpop.permute.xlu0 %439
  %v442 = vmul.f32 %v424, %v440
  %444 = vrot.lane.b32.xlu0 %v442, 64
  %v445 = vpop.permute.xlu0 %444
  %s447 = scalar_lea.vmem [#allocation3], 8
  %448 = vst.msk [vmem:[%s447] sm:$0xff] %vm189, %v445
  %s449 = scalar_lea.vmem [#allocation2], 16
  %v450 = vld [vmem:[%s449] sm:$0xff]
  %v451 = vadd.f32 %v450, %v361
  %v452 = vxor.u32 %v451, 2147483648
  %v453 = vmul.f32 %v452, 1.442695
  %v454 = vpow.pop %v453
  %v455 = vadd.f32 %v454, 1.0
  %v456 = vrcp.pop %v455
  %v457 = vmul.f32 %v455, %v456
  %v458 = vsub.f32 1.0, %v457
  %v459 = vmul.f32 %v456, %v458
  %v460 = vadd.f32 %v456, %v459
  %vm461 = vweird.f32 %v455
  %vm462 = vweird.f32 %v456
  %vm463 = vmor %vm461, %vm462
  %v464 = vsel %vm463, %v456, %v460
  %v465 = vand.u32 2147483647, %v455
  %vm466 = vcmp.eq.f32.partialorder %v465, 8.507059e+37
  %v467 = vand.u32 %v455, 2147483648
  %v468 = vor.u32 1.1754944e-38, %v467
  %v469 = vsel %vm466, %v468, %v464
  %v470 = vmul.f32 1.0, %v469
  %v471 = vtanh.pop %v451
  %v472 = vmul.f32 %v470, %v331
  %474 = vrot.lane.b32.xlu0 %v471, 32
  %v475 = vpop.permute.xlu0 %474
  %v477 = vmul.f32 %v470, %v475
  %479 = vrot.lane.b32.xlu0 %v477, 32
  %v480 = vpop.permute.xlu0 %479
  %v482 = vadd.f32 %v472, %v480
  %v483 = vtanh.pop %v482
  %485 = vrot.lane.b32.xlu0 %v483, 32
  %v486 = vpop.permute.xlu0 %485
  %v488 = vmul.f32 %v470, %v486
  %490 = vrot.lane.b32.xlu0 %v488, 64
  %v491 = vpop.permute.xlu0 %490
  %v492 = vsel %vm189, %v491, 0
  %494 = vmatpush.msra.mxu0 0.0
  %495 = vmatpush.msra.mxu0 0.0
  %496 = vmatpush.msra.mxu0 0.0
  %497 = vmatpush.msra.mxu0 0.0
  %498 = vmatpush.msra.mxu0 0.0
  %499 = vmatpush.msra.mxu0 0.0
  %500 = vmatpush.msra.mxu0 0.0
  %501 = vmatpush.msra.mxu0 0.0
  %502 = vmatpush.msra.mxu0 0.0
  %503 = vmatpush.msra.mxu0 0.0
  %504 = vmatpush.msra.mxu0 0.0
  %505 = vmatpush.msra.mxu0 0.0
  %506 = vmatpush.msra.mxu0 %v36
  %507 = vmatpush.msra.mxu0 %v35
  %508 = vmatpush.msra.mxu0 %v34
  %509 = vmatpush.msra.mxu0 %v33
  %510 = vmatmul.f32.gmra.mxu0 %v492
  %v511 = vpop.f32.mrf.mxu0
  %v512 = vadd.f32 0.0, %v511
  %513 = vdwg.mxu0
  %v514 = vsel %vm189, %v445, 0
  %516 = vmatpush.msra.mxu0 0.0
  %517 = vmatpush.msra.mxu0 0.0
  %518 = vmatpush.msra.mxu0 0.0
  %519 = vmatpush.msra.mxu0 0.0
  %520 = vmatpush.msra.mxu0 0.0
  %521 = vmatpush.msra.mxu0 0.0
  %522 = vmatpush.msra.mxu0 0.0
  %523 = vmatpush.msra.mxu0 0.0
  %524 = vmatpush.msra.mxu0 0.0
  %525 = vmatpush.msra.mxu0 0.0
  %526 = vmatpush.msra.mxu0 0.0
  %527 = vmatpush.msra.mxu0 0.0
  %528 = vmatpush.msra.mxu0 %v44
  %529 = vmatpush.msra.mxu0 %v43
  %530 = vmatpush.msra.mxu0 %v42
  %531 = vmatpush.msra.mxu0 %v41
  %532 = vmatmul.f32.gmra.mxu0 %v514
  %v533 = vpop.f32.mrf.mxu0
  %v534 = vadd.f32 0.0, %v533
  %535 = vdwg.mxu0
  %536 = vmatpush.msra.mxu0 0.0
  %537 = vmatpush.msra.mxu0 0.0
  %538 = vmatpush.msra.mxu0 0.0
  %539 = vmatpush.msra.mxu0 0.0
  %540 = vmatpush.msra.mxu0 0.0
  %541 = vmatpush.msra.mxu0 0.0
  %542 = vmatpush.msra.mxu0 0.0
  %543 = vmatpush.msra.mxu0 0.0
  %544 = vmatpush.msra.mxu0 0.0
  %545 = vmatpush.msra.mxu0 0.0
  %546 = vmatpush.msra.mxu0 0.0
  %547 = vmatpush.msra.mxu0 0.0
  %548 = vmatpush.msra.mxu0 %v40
  %549 = vmatpush.msra.mxu0 %v39
  %550 = vmatpush.msra.mxu0 %v38
  %551 = vmatpush.msra.mxu0 %v37
  %552 = vmatmul.f32.gmra.mxu0 %v492
  %v553 = vpop.f32.mrf.mxu0
  %v554 = vadd.f32 %v534, %v553
  %555 = vdwg.mxu0
  %v556 = vadd.f32 %v554, %v56
  %v557 = vxor.u32 %v556, 2147483648
  %v558 = vmul.f32 %v557, 1.442695
  %v559 = vpow.pop %v558
  %v560 = vadd.f32 %v559, 1.0
  %v561 = vrcp.pop %v560
  %v562 = vmul.f32 %v560, %v561
  %v563 = vsub.f32 1.0, %v562
  %v564 = vmul.f32 %v561, %v563
  %v565 = vadd.f32 %v561, %v564
  %vm566 = vweird.f32 %v560
  %vm567 = vweird.f32 %v561
  %vm568 = vmor %vm566, %vm567
  %v569 = vsel %vm568, %v561, %v565
  %v570 = vand.u32 2147483647, %v560
  %vm571 = vcmp.eq.f32.partialorder %v570, 8.507059e+37
  %v572 = vand.u32 %v560, 2147483648
  %v573 = vor.u32 1.1754944e-38, %v572
  %v574 = vsel %vm571, %v573, %v569
  %v575 = vmul.f32 1.0, %v574
  %v576 = vtanh.pop %v556
  %v577 = vmul.f32 %v575, %v436
  %579 = vrot.lane.b32.xlu0 %v576, 32
  %v580 = vpop.permute.xlu0 %579
  %v582 = vmul.f32 %v575, %v580
  %584 = vrot.lane.b32.xlu0 %v582, 32
  %v585 = vpop.permute.xlu0 %584
  %v587 = vadd.f32 %v577, %v585
  %v588 = vtanh.pop %v587
  %590 = vrot.lane.b32.xlu0 %v588, 32
  %v591 = vpop.permute.xlu0 %590
  %v593 = vmul.f32 %v575, %v591
  %595 = vrot.lane.b32.xlu0 %v593, 64
  %v596 = vpop.permute.xlu0 %595
  %s598 = scalar_lea.vmem [#allocation3], 16
  %599 = vst.msk [vmem:[%s598] sm:$0xff] %vm189, %v596
  %s600 = scalar_lea.vmem [#allocation2], 24
  %v601 = vld [vmem:[%s600] sm:$0xff]
  %v602 = vadd.f32 %v601, %v512
  %v603 = vxor.u32 %v602, 2147483648
  %v604 = vmul.f32 %v603, 1.442695
  %v605 = vpow.pop %v604
  %v606 = vadd.f32 %v605, 1.0
  %v607 = vrcp.pop %v606
  %v608 = vmul.f32 %v606, %v607
  %v609 = vsub.f32 1.0, %v608
  %v610 = vmul.f32 %v607, %v609
  %v611 = vadd.f32 %v607, %v610
  %vm612 = vweird.f32 %v606
  %vm613 = vweird.f32 %v607
  %vm614 = vmor %vm612, %vm613
  %v615 = vsel %vm614, %v607, %v611
  %v616 = vand.u32 2147483647, %v606
  %vm617 = vcmp.eq.f32.partialorder %v616, 8.507059e+37
  %v618 = vand.u32 %v606, 2147483648
  %v619 = vor.u32 1.1754944e-38, %v618
  %v620 = vsel %vm617, %v619, %v615
  %v621 = vmul.f32 1.0, %v620
  %v622 = vtanh.pop %v602
  %v623 = vmul.f32 %v621, %v482
  %625 = vrot.lane.b32.xlu0 %v622, 32
  %v626 = vpop.permute.xlu0 %625
  %v628 = vmul.f32 %v621, %v626
  %630 = vrot.lane.b32.xlu0 %v628, 32
  %v631 = vpop.permute.xlu0 %630
  %v633 = vadd.f32 %v623, %v631
  %v634 = vtanh.pop %v633
  %636 = vrot.lane.b32.xlu0 %v634, 32
  %v637 = vpop.permute.xlu0 %636
  %v639 = vmul.f32 %v621, %v637
  %641 = vrot.lane.b32.xlu0 %v639, 64
  %v642 = vpop.permute.xlu0 %641
  %v643 = vsel %vm189, %v642, 0
  %645 = vmatpush.msra.mxu0 0.0
  %646 = vmatpush.msra.mxu0 0.0
  %647 = vmatpush.msra.mxu0 0.0
  %648 = vmatpush.msra.mxu0 0.0
  %649 = vmatpush.msra.mxu0 0.0
  %650 = vmatpush.msra.mxu0 0.0
  %651 = vmatpush.msra.mxu0 0.0
  %652 = vmatpush.msra.mxu0 0.0
  %653 = vmatpush.msra.mxu0 0.0
  %654 = vmatpush.msra.mxu0 0.0
  %655 = vmatpush.msra.mxu0 0.0
  %656 = vmatpush.msra.mxu0 0.0
  %657 = vmatpush.msra.mxu0 %v36
  %658 = vmatpush.msra.mxu0 %v35
  %659 = vmatpush.msra.mxu0 %v34
  %660 = vmatpush.msra.mxu0 %v33
  %661 = vmatmul.f32.gmra.mxu0 %v643
  %v662 = vpop.f32.mrf.mxu0
  %v663 = vadd.f32 0.0, %v662
  %664 = vdwg.mxu0
  %v665 = vsel %vm189, %v596, 0
  %667 = vmatpush.msra.mxu0 0.0
  %668 = vmatpush.msra.mxu0 0.0
  %669 = vmatpush.msra.mxu0 0.0
  %670 = vmatpush.msra.mxu0 0.0
  %671 = vmatpush.msra.mxu0 0.0
  %672 = vmatpush.msra.mxu0 0.0
  %673 = vmatpush.msra.mxu0 0.0
  %674 = vmatpush.msra.mxu0 0.0
  %675 = vmatpush.msra.mxu0 0.0
  %676 = vmatpush.msra.mxu0 0.0
  %677 = vmatpush.msra.mxu0 0.0
  %678 = vmatpush.msra.mxu0 0.0
  %679 = vmatpush.msra.mxu0 %v44
  %680 = vmatpush.msra.mxu0 %v43
  %681 = vmatpush.msra.mxu0 %v42
  %682 = vmatpush.msra.mxu0 %v41
  %683 = vmatmul.f32.gmra.mxu0 %v665
  %v684 = vpop.f32.mrf.mxu0
  %v685 = vadd.f32 0.0, %v684
  %686 = vdwg.mxu0
  %687 = vmatpush.msra.mxu0 0.0
  %688 = vmatpush.msra.mxu0 0.0
  %689 = vmatpush.msra.mxu0 0.0
  %690 = vmatpush.msra.mxu0 0.0
  %691 = vmatpush.msra.mxu0 0.0
  %692 = vmatpush.msra.mxu0 0.0
  %693 = vmatpush.msra.mxu0 0.0
  %694 = vmatpush.msra.mxu0 0.0
  %695 = vmatpush.msra.mxu0 0.0
  %696 = vmatpush.msra.mxu0 0.0
  %697 = vmatpush.msra.mxu0 0.0
  %698 = vmatpush.msra.mxu0 0.0
  %699 = vmatpush.msra.mxu0 %v40
  %700 = vmatpush.msra.mxu0 %v39
  %701 = vmatpush.msra.mxu0 %v38
  %702 = vmatpush.msra.mxu0 %v37
  %703 = vmatmul.f32.gmra.mxu0 %v643
  %v704 = vpop.f32.mrf.mxu0
  %v705 = vadd.f32 %v685, %v704
  %706 = vdwg.mxu0
  %v707 = vadd.f32 %v705, %v56
  %v708 = vxor.u32 %v707, 2147483648
  %v709 = vmul.f32 %v708, 1.442695
  %v710 = vpow.pop %v709
  %v711 = vadd.f32 %v710, 1.0
  %v712 = vrcp.pop %v711
  %v713 = vmul.f32 %v711, %v712
  %v714 = vsub.f32 1.0, %v713
  %v715 = vmul.f32 %v712, %v714
  %v716 = vadd.f32 %v712, %v715
  %vm717 = vweird.f32 %v711
  %vm718 = vweird.f32 %v712
  %vm719 = vmor %vm717, %vm718
  %v720 = vsel %vm719, %v712, %v716
  %v721 = vand.u32 2147483647, %v711
  %vm722 = vcmp.eq.f32.partialorder %v721, 8.507059e+37
  %v723 = vand.u32 %v711, 2147483648
  %v724 = vor.u32 1.1754944e-38, %v723
  %v725 = vsel %vm722, %v724, %v720
  %v726 = vmul.f32 1.0, %v725
  %v727 = vtanh.pop %v707
  %v728 = vmul.f32 %v726, %v587
  %730 = vrot.lane.b32.xlu0 %v727, 32
  %v731 = vpop.permute.xlu0 %730
  %v733 = vmul.f32 %v726, %v731
  %735 = vrot.lane.b32.xlu0 %v733, 32
  %v736 = vpop.permute.xlu0 %735
  %v738 = vadd.f32 %v728, %v736
  %v739 = vtanh.pop %v738
  %741 = vrot.lane.b32.xlu0 %v739, 32
  %v742 = vpop.permute.xlu0 %741
  %v744 = vmul.f32 %v726, %v742
  %746 = vrot.lane.b32.xlu0 %v744, 64
  %v747 = vpop.permute.xlu0 %746
  %s749 = scalar_lea.vmem [#allocation3], 24
  %750 = vst.msk [vmem:[%s749] sm:$0xff] %vm189, %v747
  %s751 = scalar_lea.vmem [#allocation2], 32
  %v752 = vld [vmem:[%s751] sm:$0xff]
  %v753 = vadd.f32 %v752, %v663
  %v754 = vxor.u32 %v753, 2147483648
  %v755 = vmul.f32 %v754, 1.442695
  %v756 = vpow.pop %v755
  %v757 = vadd.f32 %v756, 1.0
  %v758 = vrcp.pop %v757
  %v759 = vmul.f32 %v757, %v758
  %v760 = vsub.f32 1.0, %v759
  %v761 = vmul.f32 %v758, %v760
  %v762 = vadd.f32 %v758, %v761
  %vm763 = vweird.f32 %v757
  %vm764 = vweird.f32 %v758
  %vm765 = vmor %vm763, %vm764
  %v766 = vsel %vm765, %v758, %v762
  %v767 = vand.u32 2147483647, %v757
  %vm768 = vcmp.eq.f32.partialorder %v767, 8.507059e+37
  %v769 = vand.u32 %v757, 2147483648
  %v770 = vor.u32 1.1754944e-38, %v769
  %v771 = vsel %vm768, %v770, %v766
  %v772 = vmul.f32 1.0, %v771
  %v773 = vtanh.pop %v753
  %v774 = vmul.f32 %v772, %v633
  %776 = vrot.lane.b32.xlu0 %v773, 32
  %v777 = vpop.permute.xlu0 %776
  %v779 = vmul.f32 %v772, %v777
  %781 = vrot.lane.b32.xlu0 %v779, 32
  %v782 = vpop.permute.xlu0 %781
  %v784 = vadd.f32 %v774, %v782
  %v785 = vtanh.pop %v784
  %787 = vrot.lane.b32.xlu0 %v785, 32
  %v788 = vpop.permute.xlu0 %787
  %v790 = vmul.f32 %v772, %v788
  %792 = vrot.lane.b32.xlu0 %v790, 64
  %v793 = vpop.permute.xlu0 %792
  %v794 = vsel %vm189, %v793, 0
  %796 = vmatpush.msra.mxu0 0.0
  %797 = vmatpush.msra.mxu0 0.0
  %798 = vmatpush.msra.mxu0 0.0
  %799 = vmatpush.msra.mxu0 0.0
  %800 = vmatpush.msra.mxu0 0.0
  %801 = vmatpush.msra.mxu0 0.0
  %802 = vmatpush.msra.mxu0 0.0
  %803 = vmatpush.msra.mxu0 0.0
  %804 = vmatpush.msra.mxu0 0.0
  %805 = vmatpush.msra.mxu0 0.0
  %806 = vmatpush.msra.mxu0 0.0
  %807 = vmatpush.msra.mxu0 0.0
  %808 = vmatpush.msra.mxu0 %v36
  %809 = vmatpush.msra.mxu0 %v35
  %810 = vmatpush.msra.mxu0 %v34
  %811 = vmatpush.msra.mxu0 %v33
  %812 = vmatmul.f32.gmra.mxu0 %v794
  %v813 = vpop.f32.mrf.mxu0
  %v814 = vadd.f32 0.0, %v813
  %815 = vdwg.mxu0
  %v816 = vsel %vm189, %v747, 0
  %818 = vmatpush.msra.mxu0 0.0
  %819 = vmatpush.msra.mxu0 0.0
  %820 = vmatpush.msra.mxu0 0.0
  %821 = vmatpush.msra.mxu0 0.0
  %822 = vmatpush.msra.mxu0 0.0
  %823 = vmatpush.msra.mxu0 0.0
  %824 = vmatpush.msra.mxu0 0.0
  %825 = vmatpush.msra.mxu0 0.0
  %826 = vmatpush.msra.mxu0 0.0
  %827 = vmatpush.msra.mxu0 0.0
  %828 = vmatpush.msra.mxu0 0.0
  %829 = vmatpush.msra.mxu0 0.0
  %830 = vmatpush.msra.mxu0 %v44
  %831 = vmatpush.msra.mxu0 %v43
  %832 = vmatpush.msra.mxu0 %v42
  %833 = vmatpush.msra.mxu0 %v41
  %834 = vmatmul.f32.gmra.mxu0 %v816
  %v835 = vpop.f32.mrf.mxu0
  %v836 = vadd.f32 0.0, %v835
  %837 = vdwg.mxu0
  %838 = vmatpush.msra.mxu0 0.0
  %839 = vmatpush.msra.mxu0 0.0
  %840 = vmatpush.msra.mxu0 0.0
  %841 = vmatpush.msra.mxu0 0.0
  %842 = vmatpush.msra.mxu0 0.0
  %843 = vmatpush.msra.mxu0 0.0
  %844 = vmatpush.msra.mxu0 0.0
  %845 = vmatpush.msra.mxu0 0.0
  %846 = vmatpush.msra.mxu0 0.0
  %847 = vmatpush.msra.mxu0 0.0
  %848 = vmatpush.msra.mxu0 0.0
  %849 = vmatpush.msra.mxu0 0.0
  %850 = vmatpush.msra.mxu0 %v40
  %851 = vmatpush.msra.mxu0 %v39
  %852 = vmatpush.msra.mxu0 %v38
  %853 = vmatpush.msra.mxu0 %v37
  %854 = vmatmul.f32.gmra.mxu0 %v794
  %v855 = vpop.f32.mrf.mxu0
  %v856 = vadd.f32 %v836, %v855
  %857 = vdwg.mxu0
  %v858 = vadd.f32 %v856, %v56
  %v859 = vxor.u32 %v858, 2147483648
  %v860 = vmul.f32 %v859, 1.442695
  %v861 = vpow.pop %v860
  %v862 = vadd.f32 %v861, 1.0
  %v863 = vrcp.pop %v862
  %v864 = vmul.f32 %v862, %v863
  %v865 = vsub.f32 1.0, %v864
  %v866 = vmul.f32 %v863, %v865
  %v867 = vadd.f32 %v863, %v866
  %vm868 = vweird.f32 %v862
  %vm869 = vweird.f32 %v863
  %vm870 = vmor %vm868, %vm869
  %v871 = vsel %vm870, %v863, %v867
  %v872 = vand.u32 2147483647, %v862
  %vm873 = vcmp.eq.f32.partialorder %v872, 8.507059e+37
  %v874 = vand.u32 %v862, 2147483648
  %v875 = vor.u32 1.1754944e-38, %v874
  %v876 = vsel %vm873, %v875, %v871
  %v877 = vmul.f32 1.0, %v876
  %v878 = vtanh.pop %v858
  %v879 = vmul.f32 %v877, %v738
  %881 = vrot.lane.b32.xlu0 %v878, 32
  %v882 = vpop.permute.xlu0 %881
  %v884 = vmul.f32 %v877, %v882
  %886 = vrot.lane.b32.xlu0 %v884, 32
  %v887 = vpop.permute.xlu0 %886
  %v889 = vadd.f32 %v879, %v887
  %v890 = vtanh.pop %v889
  %892 = vrot.lane.b32.xlu0 %v890, 32
  %v893 = vpop.permute.xlu0 %892
  %v895 = vmul.f32 %v877, %v893
  %897 = vrot.lane.b32.xlu0 %v895, 64
  %v898 = vpop.permute.xlu0 %897
  %s900 = scalar_lea.vmem [#allocation3], 32
  %901 = vst.msk [vmem:[%s900] sm:$0xff] %vm189, %v898
  %s902 = scalar_lea.vmem [#allocation2], 40
  %v903 = vld [vmem:[%s902] sm:$0xff]
  %v904 = vadd.f32 %v903, %v814
  %v905 = vxor.u32 %v904, 2147483648
  %v906 = vmul.f32 %v905, 1.442695
  %v907 = vpow.pop %v906
  %v908 = vadd.f32 %v907, 1.0
  %v909 = vrcp.pop %v908
  %v910 = vmul.f32 %v908, %v909
  %v911 = vsub.f32 1.0, %v910
  %v912 = vmul.f32 %v909, %v911
  %v913 = vadd.f32 %v909, %v912
  %vm914 = vweird.f32 %v908
  %vm915 = vweird.f32 %v909
  %vm916 = vmor %vm914, %vm915
  %v917 = vsel %vm916, %v909, %v913
  %v918 = vand.u32 2147483647, %v908
  %vm919 = vcmp.eq.f32.partialorder %v918, 8.507059e+37
  %v920 = vand.u32 %v908, 2147483648
  %v921 = vor.u32 1.1754944e-38, %v920
  %v922 = vsel %vm919, %v921, %v917
  %v923 = vmul.f32 1.0, %v922
  %v924 = vtanh.pop %v904
  %v925 = vmul.f32 %v923, %v784
  %927 = vrot.lane.b32.xlu0 %v924, 32
  %v928 = vpop.permute.xlu0 %927
  %v930 = vmul.f32 %v923, %v928
  %932 = vrot.lane.b32.xlu0 %v930, 32
  %v933 = vpop.permute.xlu0 %932
  %v935 = vadd.f32 %v925, %v933
  %v936 = vtanh.pop %v935
  %938 = vrot.lane.b32.xlu0 %v936, 32
  %v939 = vpop.permute.xlu0 %938
  %v941 = vmul.f32 %v923, %v939
  %943 = vrot.lane.b32.xlu0 %v941, 64
  %v944 = vpop.permute.xlu0 %943
  %v945 = vsel %vm189, %v944, 0
  %947 = vmatpush.msra.mxu0 0.0
  %948 = vmatpush.msra.mxu0 0.0
  %949 = vmatpush.msra.mxu0 0.0
  %950 = vmatpush.msra.mxu0 0.0
  %951 = vmatpush.msra.mxu0 0.0
  %952 = vmatpush.msra.mxu0 0.0
  %953 = vmatpush.msra.mxu0 0.0
  %954 = vmatpush.msra.mxu0 0.0
  %955 = vmatpush.msra.mxu0 0.0
  %956 = vmatpush.msra.mxu0 0.0
  %957 = vmatpush.msra.mxu0 0.0
  %958 = vmatpush.msra.mxu0 0.0
  %959 = vmatpush.msra.mxu0 %v36
  %960 = vmatpush.msra.mxu0 %v35
  %961 = vmatpush.msra.mxu0 %v34
  %962 = vmatpush.msra.mxu0 %v33
  %963 = vmatmul.f32.gmra.mxu0 %v945
  %v964 = vpop.f32.mrf.mxu0
  %v965 = vadd.f32 0.0, %v964
  %966 = vdwg.mxu0
  %v967 = vsel %vm189, %v898, 0
  %969 = vmatpush.msra.mxu0 0.0
  %970 = vmatpush.msra.mxu0 0.0
  %971 = vmatpush.msra.mxu0 0.0
  %972 = vmatpush.msra.mxu0 0.0
  %973 = vmatpush.msra.mxu0 0.0
  %974 = vmatpush.msra.mxu0 0.0
  %975 = vmatpush.msra.mxu0 0.0
  %976 = vmatpush.msra.mxu0 0.0
  %977 = vmatpush.msra.mxu0 0.0
  %978 = vmatpush.msra.mxu0 0.0
  %979 = vmatpush.msra.mxu0 0.0
  %980 = vmatpush.msra.mxu0 0.0
  %981 = vmatpush.msra.mxu0 %v44
  %982 = vmatpush.msra.mxu0 %v43
  %983 = vmatpush.msra.mxu0 %v42
  %984 = vmatpush.msra.mxu0 %v41
  %985 = vmatmul.f32.gmra.mxu0 %v967
  %v986 = vpop.f32.mrf.mxu0
  %v987 = vadd.f32 0.0, %v986
  %988 = vdwg.mxu0
  %989 = vmatpush.msra.mxu0 0.0
  %990 = vmatpush.msra.mxu0 0.0
  %991 = vmatpush.msra.mxu0 0.0
  %992 = vmatpush.msra.mxu0 0.0
  %993 = vmatpush.msra.mxu0 0.0
  %994 = vmatpush.msra.mxu0 0.0
  %995 = vmatpush.msra.mxu0 0.0
  %996 = vmatpush.msra.mxu0 0.0
  %997 = vmatpush.msra.mxu0 0.0
  %998 = vmatpush.msra.mxu0 0.0
  %999 = vmatpush.msra.mxu0 0.0
  %1000 = vmatpush.msra.mxu0 0.0
  %1001 = vmatpush.msra.mxu0 %v40
  %1002 = vmatpush.msra.mxu0 %v39
  %1003 = vmatpush.msra.mxu0 %v38
  %1004 = vmatpush.msra.mxu0 %v37
  %1005 = vmatmul.f32.gmra.mxu0 %v945
  %v1006 = vpop.f32.mrf.mxu0
  %v1007 = vadd.f32 %v987, %v1006
  %1008 = vdwg.mxu0
  %v1009 = vadd.f32 %v1007, %v56
  %v1010 = vxor.u32 %v1009, 2147483648
  %v1011 = vmul.f32 %v1010, 1.442695
  %v1012 = vpow.pop %v1011
  %v1013 = vadd.f32 %v1012, 1.0
  %v1014 = vrcp.pop %v1013
  %v1015 = vmul.f32 %v1013, %v1014
  %v1016 = vsub.f32 1.0, %v1015
  %v1017 = vmul.f32 %v1014, %v1016
  %v1018 = vadd.f32 %v1014, %v1017
  %vm1019 = vweird.f32 %v1013
  %vm1020 = vweird.f32 %v1014
  %vm1021 = vmor %vm1019, %vm1020
  %v1022 = vsel %vm1021, %v1014, %v1018
  %v1023 = vand.u32 2147483647, %v1013
  %vm1024 = vcmp.eq.f32.partialorder %v1023, 8.507059e+37
  %v1025 = vand.u32 %v1013, 2147483648
  %v1026 = vor.u32 1.1754944e-38, %v1025
  %v1027 = vsel %vm1024, %v1026, %v1022
  %v1028 = vmul.f32 1.0, %v1027
  %v1029 = vtanh.pop %v1009
  %v1030 = vmul.f32 %v1028, %v889
  %1032 = vrot.lane.b32.xlu0 %v1029, 32
  %v1033 = vpop.permute.xlu0 %1032
  %v1035 = vmul.f32 %v1028, %v1033
  %1037 = vrot.lane.b32.xlu0 %v1035, 32
  %v1038 = vpop.permute.xlu0 %1037
  %v1040 = vadd.f32 %v1030, %v1038
  %v1041 = vtanh.pop %v1040
  %1043 = vrot.lane.b32.xlu0 %v1041, 32
  %v1044 = vpop.permute.xlu0 %1043
  %v1046 = vmul.f32 %v1028, %v1044
  %1048 = vrot.lane.b32.xlu0 %v1046, 64
  %v1049 = vpop.permute.xlu0 %1048
  %s1051 = scalar_lea.vmem [#allocation3], 40
  %1052 = vst.msk [vmem:[%s1051] sm:$0xff] %vm189, %v1049
  %s1053 = scalar_lea.vmem [#allocation2], 48
  %v1054 = vld [vmem:[%s1053] sm:$0xff]
  %v1055 = vadd.f32 %v1054, %v965
  %v1056 = vxor.u32 %v1055, 2147483648
  %v1057 = vmul.f32 %v1056, 1.442695
  %v1058 = vpow.pop %v1057
  %v1059 = vadd.f32 %v1058, 1.0
  %v1060 = vrcp.pop %v1059
  %v1061 = vmul.f32 %v1059, %v1060
  %v1062 = vsub.f32 1.0, %v1061
  %v1063 = vmul.f32 %v1060, %v1062
  %v1064 = vadd.f32 %v1060, %v1063
  %vm1065 = vweird.f32 %v1059
  %vm1066 = vweird.f32 %v1060
  %vm1067 = vmor %vm1065, %vm1066
  %v1068 = vsel %vm1067, %v1060, %v1064
  %v1069 = vand.u32 2147483647, %v1059
  %vm1070 = vcmp.eq.f32.partialorder %v1069, 8.507059e+37
  %v1071 = vand.u32 %v1059, 2147483648
  %v1072 = vor.u32 1.1754944e-38, %v1071
  %v1073 = vsel %vm1070, %v1072, %v1068
  %v1074 = vmul.f32 1.0, %v1073
  %v1075 = vtanh.pop %v1055
  %v1076 = vmul.f32 %v1074, %v935
  %1078 = vrot.lane.b32.xlu0 %v1075, 32
  %v1079 = vpop.permute.xlu0 %1078
  %v1081 = vmul.f32 %v1074, %v1079
  %1083 = vrot.lane.b32.xlu0 %v1081, 32
  %v1084 = vpop.permute.xlu0 %1083
  %v1086 = vadd.f32 %v1076, %v1084
  %v1087 = vtanh.pop %v1086
  %1089 = vrot.lane.b32.xlu0 %v1087, 32
  %v1090 = vpop.permute.xlu0 %1089
  %v1092 = vmul.f32 %v1074, %v1090
  %1094 = vrot.lane.b32.xlu0 %v1092, 64
  %v1095 = vpop.permute.xlu0 %1094
  %v1096 = vsel %vm189, %v1095, 0
  %1098 = vmatpush.msra.mxu0 0.0
  %1099 = vmatpush.msra.mxu0 0.0
  %1100 = vmatpush.msra.mxu0 0.0
  %1101 = vmatpush.msra.mxu0 0.0
  %1102 = vmatpush.msra.mxu0 0.0
  %1103 = vmatpush.msra.mxu0 0.0
  %1104 = vmatpush.msra.mxu0 0.0
  %1105 = vmatpush.msra.mxu0 0.0
  %1106 = vmatpush.msra.mxu0 0.0
  %1107 = vmatpush.msra.mxu0 0.0
  %1108 = vmatpush.msra.mxu0 0.0
  %1109 = vmatpush.msra.mxu0 0.0
  %1110 = vmatpush.msra.mxu0 %v36
  %1111 = vmatpush.msra.mxu0 %v35
  %1112 = vmatpush.msra.mxu0 %v34
  %1113 = vmatpush.msra.mxu0 %v33
  %1114 = vmatmul.f32.gmra.mxu0 %v1096
  %v1115 = vpop.f32.mrf.mxu0
  %v1116 = vadd.f32 0.0, %v1115
  %1117 = vdwg.mxu0
  %v1118 = vsel %vm189, %v1049, 0
  %1120 = vmatpush.msra.mxu0 0.0
  %1121 = vmatpush.msra.mxu0 0.0
  %1122 = vmatpush.msra.mxu0 0.0
  %1123 = vmatpush.msra.mxu0 0.0
  %1124 = vmatpush.msra.mxu0 0.0
  %1125 = vmatpush.msra.mxu0 0.0
  %1126 = vmatpush.msra.mxu0 0.0
  %1127 = vmatpush.msra.mxu0 0.0
  %1128 = vmatpush.msra.mxu0 0.0
  %1129 = vmatpush.msra.mxu0 0.0
  %1130 = vmatpush.msra.mxu0 0.0
  %1131 = vmatpush.msra.mxu0 0.0
  %1132 = vmatpush.msra.mxu0 %v44
  %1133 = vmatpush.msra.mxu0 %v43
  %1134 = vmatpush.msra.mxu0 %v42
  %1135 = vmatpush.msra.mxu0 %v41
  %1136 = vmatmul.f32.gmra.mxu0 %v1118
  %v1137 = vpop.f32.mrf.mxu0
  %v1138 = vadd.f32 0.0, %v1137
  %1139 = vdwg.mxu0
  %1140 = vmatpush.msra.mxu0 0.0
  %1141 = vmatpush.msra.mxu0 0.0
  %1142 = vmatpush.msra.mxu0 0.0
  %1143 = vmatpush.msra.mxu0 0.0
  %1144 = vmatpush.msra.mxu0 0.0
  %1145 = vmatpush.msra.mxu0 0.0
  %1146 = vmatpush.msra.mxu0 0.0
  %1147 = vmatpush.msra.mxu0 0.0
  %1148 = vmatpush.msra.mxu0 0.0
  %1149 = vmatpush.msra.mxu0 0.0
  %1150 = vmatpush.msra.mxu0 0.0
  %1151 = vmatpush.msra.mxu0 0.0
  %1152 = vmatpush.msra.mxu0 %v40
  %1153 = vmatpush.msra.mxu0 %v39
  %1154 = vmatpush.msra.mxu0 %v38
  %1155 = vmatpush.msra.mxu0 %v37
  %1156 = vmatmul.f32.gmra.mxu0 %v1096
  %v1157 = vpop.f32.mrf.mxu0
  %v1158 = vadd.f32 %v1138, %v1157
  %1159 = vdwg.mxu0
  %v1160 = vadd.f32 %v1158, %v56
  %v1161 = vxor.u32 %v1160, 2147483648
  %v1162 = vmul.f32 %v1161, 1.442695
  %v1163 = vpow.pop %v1162
  %v1164 = vadd.f32 %v1163, 1.0
  %v1165 = vrcp.pop %v1164
  %v1166 = vmul.f32 %v1164, %v1165
  %v1167 = vsub.f32 1.0, %v1166
  %v1168 = vmul.f32 %v1165, %v1167
  %v1169 = vadd.f32 %v1165, %v1168
  %vm1170 = vweird.f32 %v1164
  %vm1171 = vweird.f32 %v1165
  %vm1172 = vmor %vm1170, %vm1171
  %v1173 = vsel %vm1172, %v1165, %v1169
  %v1174 = vand.u32 2147483647, %v1164
  %vm1175 = vcmp.eq.f32.partialorder %v1174, 8.507059e+37
  %v1176 = vand.u32 %v1164, 2147483648
  %v1177 = vor.u32 1.1754944e-38, %v1176
  %v1178 = vsel %vm1175, %v1177, %v1173
  %v1179 = vmul.f32 1.0, %v1178
  %v1180 = vtanh.pop %v1160
  %v1181 = vmul.f32 %v1179, %v1040
  %1183 = vrot.lane.b32.xlu0 %v1180, 32
  %v1184 = vpop.permute.xlu0 %1183
  %v1186 = vmul.f32 %v1179, %v1184
  %1188 = vrot.lane.b32.xlu0 %v1186, 32
  %v1189 = vpop.permute.xlu0 %1188
  %v1191 = vadd.f32 %v1181, %v1189
  %v1192 = vtanh.pop %v1191
  %1194 = vrot.lane.b32.xlu0 %v1192, 32
  %v1195 = vpop.permute.xlu0 %1194
  %v1197 = vmul.f32 %v1179, %v1195
  %1199 = vrot.lane.b32.xlu0 %v1197, 64
  %v1200 = vpop.permute.xlu0 %1199
  %s1202 = scalar_lea.vmem [#allocation3], 48
  %1203 = vst.msk [vmem:[%s1202] sm:$0xff] %vm189, %v1200
  %s1204 = scalar_lea.vmem [#allocation2], 56
  %v1205 = vld [vmem:[%s1204] sm:$0xff]
  %v1206 = vadd.f32 %v1205, %v1116
  %v1207 = vxor.u32 %v1206, 2147483648
  %v1208 = vmul.f32 %v1207, 1.442695
  %v1209 = vpow.pop %v1208
  %v1210 = vadd.f32 %v1209, 1.0
  %v1211 = vrcp.pop %v1210
  %v1212 = vmul.f32 %v1210, %v1211
  %v1213 = vsub.f32 1.0, %v1212
  %v1214 = vmul.f32 %v1211, %v1213
  %v1215 = vadd.f32 %v1211, %v1214
  %vm1216 = vweird.f32 %v1210
  %vm1217 = vweird.f32 %v1211
  %vm1218 = vmor %vm1216, %vm1217
  %v1219 = vsel %vm1218, %v1211, %v1215
  %v1220 = vand.u32 2147483647, %v1210
  %vm1221 = vcmp.eq.f32.partialorder %v1220, 8.507059e+37
  %v1222 = vand.u32 %v1210, 2147483648
  %v1223 = vor.u32 1.1754944e-38, %v1222
  %v1224 = vsel %vm1221, %v1223, %v1219
  %v1225 = vmul.f32 1.0, %v1224
  %v1226 = vtanh.pop %v1206
  %v1227 = vmul.f32 %v1225, %v1086
  %1229 = vrot.lane.b32.xlu0 %v1226, 32
  %v1230 = vpop.permute.xlu0 %1229
  %v1232 = vmul.f32 %v1225, %v1230
  %1234 = vrot.lane.b32.xlu0 %v1232, 32
  %v1235 = vpop.permute.xlu0 %1234
  %v1237 = vadd.f32 %v1227, %v1235
  %v1238 = vtanh.pop %v1237
  %1240 = vrot.lane.b32.xlu0 %v1238, 32
  %v1241 = vpop.permute.xlu0 %1240
  %v1243 = vmul.f32 %v1225, %v1241
  %v1244 = vsel %vm189, %v1200, 0
  %1246 = vmatpush.msra.mxu0 0.0
  %1247 = vmatpush.msra.mxu0 0.0
  %1248 = vmatpush.msra.mxu0 0.0
  %1249 = vmatpush.msra.mxu0 0.0
  %1250 = vmatpush.msra.mxu0 0.0
  %1251 = vmatpush.msra.mxu0 0.0
  %1252 = vmatpush.msra.mxu0 0.0
  %1253 = vmatpush.msra.mxu0 0.0
  %1254 = vmatpush.msra.mxu0 0.0
  %1255 = vmatpush.msra.mxu0 0.0
  %1256 = vmatpush.msra.mxu0 0.0
  %1257 = vmatpush.msra.mxu0 0.0
  %1258 = vmatpush.msra.mxu0 %v44
  %1259 = vmatpush.msra.mxu0 %v43
  %1260 = vmatpush.msra.mxu0 %v42
  %1261 = vmatpush.msra.mxu0 %v41
  %1262 = vmatmul.f32.gmra.mxu0 %v1244
  %v1263 = vpop.f32.mrf.mxu0
  %v1264 = vadd.f32 0.0, %v1263
  %1265 = vdwg.mxu0
  %1267 = vrot.lane.b32.xlu0 %v1243, 64
  %v1268 = vpop.permute.xlu0 %1267
  %v1269 = vsel %vm189, %v1268, 0
  %1271 = vmatpush.msra.mxu0 0.0
  %1272 = vmatpush.msra.mxu0 0.0
  %1273 = vmatpush.msra.mxu0 0.0
  %1274 = vmatpush.msra.mxu0 0.0
  %1275 = vmatpush.msra.mxu0 0.0
  %1276 = vmatpush.msra.mxu0 0.0
  %1277 = vmatpush.msra.mxu0 0.0
  %1278 = vmatpush.msra.mxu0 0.0
  %1279 = vmatpush.msra.mxu0 0.0
  %1280 = vmatpush.msra.mxu0 0.0
  %1281 = vmatpush.msra.mxu0 0.0
  %1282 = vmatpush.msra.mxu0 0.0
  %1283 = vmatpush.msra.mxu0 %v40
  %1284 = vmatpush.msra.mxu0 %v39
  %1285 = vmatpush.msra.mxu0 %v38
  %1286 = vmatpush.msra.mxu0 %v37
  %1287 = vmatmul.f32.gmra.mxu0 %v1269
  %v1288 = vpop.f32.mrf.mxu0
  %v1289 = vadd.f32 %v1264, %v1288
  %1290 = vdwg.mxu0
  %v1291 = vadd.f32 %v1289, %v56
  %v1292 = vxor.u32 %v1291, 2147483648
  %v1293 = vmul.f32 %v1292, 1.442695
  %v1294 = vpow.pop %v1293
  %v1295 = vadd.f32 %v1294, 1.0
  %v1296 = vrcp.pop %v1295
  %v1297 = vmul.f32 %v1295, %v1296
  %v1298 = vsub.f32 1.0, %v1297
  %v1299 = vmul.f32 %v1296, %v1298
  %v1300 = vadd.f32 %v1296, %v1299
  %vm1301 = vweird.f32 %v1295
  %vm1302 = vweird.f32 %v1296
  %vm1303 = vmor %vm1301, %vm1302
  %v1304 = vsel %vm1303, %v1296, %v1300
  %v1305 = vand.u32 2147483647, %v1295
  %vm1306 = vcmp.eq.f32.partialorder %v1305, 8.507059e+37
  %v1307 = vand.u32 %v1295, 2147483648
  %v1308 = vor.u32 1.1754944e-38, %v1307
  %v1309 = vsel %vm1306, %v1308, %v1304
  %v1310 = vmul.f32 1.0, %v1309
  %v1311 = vtanh.pop %v1291
  %v1312 = vmul.f32 %v1310, %v1191
  %1314 = vrot.lane.b32.xlu0 %v1311, 32
  %v1315 = vpop.permute.xlu0 %1314
  %v1317 = vmul.f32 %v1310, %v1315
  %1319 = vrot.lane.b32.xlu0 %v1317, 32
  %v1320 = vpop.permute.xlu0 %1319
  %v1322 = vadd.f32 %v1312, %v1320
  %v1323 = vtanh.pop %v1322
  %1325 = vrot.lane.b32.xlu0 %v1323, 32
  %v1326 = vpop.permute.xlu0 %1325
  %v1328 = vmul.f32 %v1310, %v1326
  %1330 = vrot.lane.b32.xlu0 %v1328, 64
  %v1331 = vpop.permute.xlu0 %1330
  %s1333 = scalar_lea.vmem [#allocation3], 56
  %1334 = vst.msk [vmem:[%s1333] sm:$0xff] %vm189, %v1331
  %v1335 = vsel %vm189, %v1331, 0
  %1337 = vmatpush.msra.mxu0 0.0
  %1338 = vmatpush.msra.mxu0 0.0
  %1339 = vmatpush.msra.mxu0 0.0
  %1340 = vmatpush.msra.mxu0 0.0
  %1341 = vmatpush.msra.mxu0 0.0
  %1342 = vmatpush.msra.mxu0 0.0
  %1343 = vmatpush.msra.mxu0 0.0
  %1344 = vmatpush.msra.mxu0 0.0
  %1345 = vmatpush.msra.mxu0 0.0
  %1346 = vmatpush.msra.mxu0 0.0
  %1347 = vmatpush.msra.mxu0 0.0
  %1348 = vmatpush.msra.mxu0 0.0
  %1349 = vmatpush.msra.mxu0 %v50
  %1350 = vmatpush.msra.mxu0 %v49
  %1351 = vmatpush.msra.mxu0 %v48
  %1352 = vmatpush.msra.mxu0 %v47
  %1353 = vmatmul.f32.gmra.mxu0 %v1335
  %v1354 = vpop.f32.mrf.mxu0
  %v1355 = vadd.f32 %v59, %v1354
  %1356 = vdwg.mxu0
  %v1358 = vsel %vm69, %v1355, 0
  %1360 = vmatpush.msra.mxu0 0.0
  %1361 = vmatpush.msra.mxu0 0.0
  %1362 = vmatpush.msra.mxu0 0.0
  %1363 = vmatpush.msra.mxu0 0.0
  %1364 = vmatpush.msra.mxu0 0.0
  %1365 = vmatpush.msra.mxu0 0.0
  %1366 = vmatpush.msra.mxu0 0.0
  %1367 = vmatpush.msra.mxu0 0.0
  %1368 = vmatpush.msra.mxu0 0.0
  %1369 = vmatpush.msra.mxu0 0.0
  %1370 = vmatpush.msra.mxu0 0.0
  %1371 = vmatpush.msra.mxu0 0.0
  %1372 = vmatpush.msra.mxu0 0.0
  %1373 = vmatpush.msra.mxu0 0.0
  %1374 = vmatpush.msra.mxu0 0.0
  %1375 = vmatpush.msra.mxu0 %v96
  %1376 = vmatmul.f32.gmra.mxu0 %v1358
  %v1377 = vpop.f32.mrf.mxu0
  %v1378 = vadd.f32 0.0, %v1377
  %1379 = vdwg.mxu0
  %1380 = vmatpush.msra.mxu0 0.0
  %1381 = vmatpush.msra.mxu0 0.0
  %1382 = vmatpush.msra.mxu0 0.0
  %1383 = vmatpush.msra.mxu0 0.0
  %1384 = vmatpush.msra.mxu0 0.0
  %1385 = vmatpush.msra.mxu0 0.0
  %1386 = vmatpush.msra.mxu0 0.0
  %1387 = vmatpush.msra.mxu0 0.0
  %1388 = vmatpush.msra.mxu0 0.0
  %1389 = vmatpush.msra.mxu0 0.0
  %1390 = vmatpush.msra.mxu0 0.0
  %1391 = vmatpush.msra.mxu0 0.0
  %1392 = vmatpush.msra.mxu0 %v36
  %1393 = vmatpush.msra.mxu0 %v35
  %1394 = vmatpush.msra.mxu0 %v34
  %1395 = vmatpush.msra.mxu0 %v33
  %1396 = vmatmul.f32.gmra.mxu0 %v1269
  %v1397 = vpop.f32.mrf.mxu0
  %v1398 = vadd.f32 %v1378, %v1397
  %1399 = vdwg.mxu0
  %v1400 = vadd.f32 %v1398, %v53
  %v1401 = vxor.u32 %v1400, 2147483648
  %v1402 = vmul.f32 %v1401, 1.442695
  %v1403 = vpow.pop %v1402
  %v1404 = vadd.f32 %v1403, 1.0
  %v1405 = vrcp.pop %v1404
  %v1406 = vmul.f32 %v1404, %v1405
  %v1407 = vsub.f32 1.0, %v1406
  %v1408 = vmul.f32 %v1405, %v1407
  %v1409 = vadd.f32 %v1405, %v1408
  %vm1410 = vweird.f32 %v1404
  %vm1411 = vweird.f32 %v1405
  %vm1412 = vmor %vm1410, %vm1411
  %v1413 = vsel %vm1412, %v1405, %v1409
  %v1414 = vand.u32 2147483647, %v1404
  %vm1415 = vcmp.eq.f32.partialorder %v1414, 8.507059e+37
  %v1416 = vand.u32 %v1404, 2147483648
  %v1417 = vor.u32 1.1754944e-38, %v1416
  %v1418 = vsel %vm1415, %v1417, %v1413
  %v1419 = vmul.f32 1.0, %v1418
  %v1420 = vtanh.pop %v1400
  %v1421 = vmul.f32 %v1419, %v1237
  %1423 = vrot.lane.b32.xlu0 %v1420, 32
  %v1424 = vpop.permute.xlu0 %1423
  %v1426 = vmul.f32 %v1419, %v1424
  %1428 = vrot.lane.b32.xlu0 %v1426, 32
  %v1429 = vpop.permute.xlu0 %1428
  %v1431 = vadd.f32 %v1421, %v1429
  %v1432 = vtanh.pop %v1431
  %1434 = vrot.lane.b32.xlu0 %v1432, 32
  %v1435 = vpop.permute.xlu0 %1434
  %v1437 = vmul.f32 %v1419, %v1435
  %1438 = vmatpush.msra.mxu0 0.0
  %1439 = vmatpush.msra.mxu0 0.0
  %1440 = vmatpush.msra.mxu0 0.0
  %1441 = vmatpush.msra.mxu0 0.0
  %1442 = vmatpush.msra.mxu0 0.0
  %1443 = vmatpush.msra.mxu0 0.0
  %1444 = vmatpush.msra.mxu0 0.0
  %1445 = vmatpush.msra.mxu0 0.0
  %1446 = vmatpush.msra.mxu0 0.0
  %1447 = vmatpush.msra.mxu0 0.0
  %1448 = vmatpush.msra.mxu0 0.0
  %1449 = vmatpush.msra.mxu0 0.0
  %1450 = vmatpush.msra.mxu0 %v44
  %1451 = vmatpush.msra.mxu0 %v43
  %1452 = vmatpush.msra.mxu0 %v42
  %1453 = vmatpush.msra.mxu0 %v41
  %1454 = vmatmul.f32.gmra.mxu0 %v1335
  %v1455 = vpop.f32.mrf.mxu0
  %v1456 = vadd.f32 0.0, %v1455
  %1457 = vdwg.mxu0
  %1459 = vrot.lane.b32.xlu0 %v1437, 64
  %v1460 = vpop.permute.xlu0 %1459
  %v1461 = vsel %vm189, %v1460, 0
  %1463 = vmatpush.msra.mxu0 0.0
  %1464 = vmatpush.msra.mxu0 0.0
  %1465 = vmatpush.msra.mxu0 0.0
  %1466 = vmatpush.msra.mxu0 0.0
  %1467 = vmatpush.msra.mxu0 0.0
  %1468 = vmatpush.msra.mxu0 0.0
  %1469 = vmatpush.msra.mxu0 0.0
  %1470 = vmatpush.msra.mxu0 0.0
  %1471 = vmatpush.msra.mxu0 0.0
  %1472 = vmatpush.msra.mxu0 0.0
  %1473 = vmatpush.msra.mxu0 0.0
  %1474 = vmatpush.msra.mxu0 0.0
  %1475 = vmatpush.msra.mxu0 %v40
  %1476 = vmatpush.msra.mxu0 %v39
  %1477 = vmatpush.msra.mxu0 %v38
  %1478 = vmatpush.msra.mxu0 %v37
  %1479 = vmatmul.f32.gmra.mxu0 %v1461
  %v1480 = vpop.f32.mrf.mxu0
  %v1481 = vadd.f32 %v1456, %v1480
  %1482 = vdwg.mxu0
  %v1483 = vadd.f32 %v1481, %v56
  %v1484 = vxor.u32 %v1483, 2147483648
  %v1485 = vmul.f32 %v1484, 1.442695
  %v1486 = vpow.pop %v1485
  %v1487 = vadd.f32 %v1486, 1.0
  %v1488 = vrcp.pop %v1487
  %v1489 = vmul.f32 %v1487, %v1488
  %v1490 = vsub.f32 1.0, %v1489
  %v1491 = vmul.f32 %v1488, %v1490
  %v1492 = vadd.f32 %v1488, %v1491
  %vm1493 = vweird.f32 %v1487
  %vm1494 = vweird.f32 %v1488
  %vm1495 = vmor %vm1493, %vm1494
  %v1496 = vsel %vm1495, %v1488, %v1492
  %v1497 = vand.u32 2147483647, %v1487
  %vm1498 = vcmp.eq.f32.partialorder %v1497, 8.507059e+37
  %v1499 = vand.u32 %v1487, 2147483648
  %v1500 = vor.u32 1.1754944e-38, %v1499
  %v1501 = vsel %vm1498, %v1500, %v1496
  %v1502 = vmul.f32 1.0, %v1501
  %v1503 = vtanh.pop %v1483
  %v1504 = vmul.f32 %v1502, %v1322
  %1506 = vrot.lane.b32.xlu0 %v1503, 32
  %v1507 = vpop.permute.xlu0 %1506
  %v1509 = vmul.f32 %v1502, %v1507
  %1511 = vrot.lane.b32.xlu0 %v1509, 32
  %v1512 = vpop.permute.xlu0 %1511
  %v1514 = vadd.f32 %v1504, %v1512
  %v1515 = vtanh.pop %v1514
  %1517 = vrot.lane.b32.xlu0 %v1515, 32
  %v1518 = vpop.permute.xlu0 %1517
  %v1520 = vmul.f32 %v1502, %v1518
  %1522 = vrot.lane.b32.xlu0 %v1520, 64
  %v1523 = vpop.permute.xlu0 %1522
  %s1525 = scalar_lea.vmem [#allocation3], 64
  %1526 = vst.msk [vmem:[%s1525] sm:$0xff] %vm189, %v1523
  %v1527 = vsel %vm189, %v1523, 0
  %1529 = vmatpush.msra.mxu0 0.0
  %1530 = vmatpush.msra.mxu0 0.0
  %1531 = vmatpush.msra.mxu0 0.0
  %1532 = vmatpush.msra.mxu0 0.0
  %1533 = vmatpush.msra.mxu0 0.0
  %1534 = vmatpush.msra.mxu0 0.0
  %1535 = vmatpush.msra.mxu0 0.0
  %1536 = vmatpush.msra.mxu0 0.0
  %1537 = vmatpush.msra.mxu0 0.0
  %1538 = vmatpush.msra.mxu0 0.0
  %1539 = vmatpush.msra.mxu0 0.0
  %1540 = vmatpush.msra.mxu0 0.0
  %1541 = vmatpush.msra.mxu0 %v50
  %1542 = vmatpush.msra.mxu0 %v49
  %1543 = vmatpush.msra.mxu0 %v48
  %1544 = vmatpush.msra.mxu0 %v47
  %1545 = vmatmul.f32.gmra.mxu0 %v1527
  %v1546 = vpop.f32.mrf.mxu0
  %v1547 = vadd.f32 %v59, %v1546
  %1548 = vdwg.mxu0
  %v1550 = vsel %vm69, %v1547, 0
  %1552 = vmatpush.msra.mxu0 0.0
  %1553 = vmatpush.msra.mxu0 0.0
  %1554 = vmatpush.msra.mxu0 0.0
  %1555 = vmatpush.msra.mxu0 0.0
  %1556 = vmatpush.msra.mxu0 0.0
  %1557 = vmatpush.msra.mxu0 0.0
  %1558 = vmatpush.msra.mxu0 0.0
  %1559 = vmatpush.msra.mxu0 0.0
  %1560 = vmatpush.msra.mxu0 0.0
  %1561 = vmatpush.msra.mxu0 0.0
  %1562 = vmatpush.msra.mxu0 0.0
  %1563 = vmatpush.msra.mxu0 0.0
  %1564 = vmatpush.msra.mxu0 0.0
  %1565 = vmatpush.msra.mxu0 0.0
  %1566 = vmatpush.msra.mxu0 0.0
  %1567 = vmatpush.msra.mxu0 %v96
  %1568 = vmatmul.f32.gmra.mxu0 %v1550
  %v1569 = vpop.f32.mrf.mxu0
  %v1570 = vadd.f32 0.0, %v1569
  %1571 = vdwg.mxu0
  %1572 = vmatpush.msra.mxu0 0.0
  %1573 = vmatpush.msra.mxu0 0.0
  %1574 = vmatpush.msra.mxu0 0.0
  %1575 = vmatpush.msra.mxu0 0.0
  %1576 = vmatpush.msra.mxu0 0.0
  %1577 = vmatpush.msra.mxu0 0.0
  %1578 = vmatpush.msra.mxu0 0.0
  %1579 = vmatpush.msra.mxu0 0.0
  %1580 = vmatpush.msra.mxu0 0.0
  %1581 = vmatpush.msra.mxu0 0.0
  %1582 = vmatpush.msra.mxu0 0.0
  %1583 = vmatpush.msra.mxu0 0.0
  %1584 = vmatpush.msra.mxu0 %v36
  %1585 = vmatpush.msra.mxu0 %v35
  %1586 = vmatpush.msra.mxu0 %v34
  %1587 = vmatpush.msra.mxu0 %v33
  %1588 = vmatmul.f32.gmra.mxu0 %v1461
  %v1589 = vpop.f32.mrf.mxu0
  %v1590 = vadd.f32 %v1570, %v1589
  %1591 = vdwg.mxu0
  %v1592 = vadd.f32 %v1590, %v53
  %v1593 = vxor.u32 %v1592, 2147483648
  %v1594 = vmul.f32 %v1593, 1.442695
  %v1595 = vpow.pop %v1594
  %v1596 = vadd.f32 %v1595, 1.0
  %v1597 = vrcp.pop %v1596
  %v1598 = vmul.f32 %v1596, %v1597
  %v1599 = vsub.f32 1.0, %v1598
  %v1600 = vmul.f32 %v1597, %v1599
  %v1601 = vadd.f32 %v1597, %v1600
  %vm1602 = vweird.f32 %v1596
  %vm1603 = vweird.f32 %v1597
  %vm1604 = vmor %vm1602, %vm1603
  %v1605 = vsel %vm1604, %v1597, %v1601
  %v1606 = vand.u32 2147483647, %v1596
  %vm1607 = vcmp.eq.f32.partialorder %v1606, 8.507059e+37
  %v1608 = vand.u32 %v1596, 2147483648
  %v1609 = vor.u32 1.1754944e-38, %v1608
  %v1610 = vsel %vm1607, %v1609, %v1605
  %v1611 = vmul.f32 1.0, %v1610
  %v1612 = vtanh.pop %v1592
  %v1613 = vmul.f32 %v1611, %v1431
  %1615 = vrot.lane.b32.xlu0 %v1612, 32
  %v1616 = vpop.permute.xlu0 %1615
  %v1618 = vmul.f32 %v1611, %v1616
  %1620 = vrot.lane.b32.xlu0 %v1618, 32
  %v1621 = vpop.permute.xlu0 %1620
  %v1623 = vadd.f32 %v1613, %v1621
  %v1624 = vtanh.pop %v1623
  %1626 = vrot.lane.b32.xlu0 %v1624, 32
  %v1627 = vpop.permute.xlu0 %1626
  %v1629 = vmul.f32 %v1611, %v1627
  %1630 = vmatpush.msra.mxu0 0.0
  %1631 = vmatpush.msra.mxu0 0.0
  %1632 = vmatpush.msra.mxu0 0.0
  %1633 = vmatpush.msra.mxu0 0.0
  %1634 = vmatpush.msra.mxu0 0.0
  %1635 = vmatpush.msra.mxu0 0.0
  %1636 = vmatpush.msra.mxu0 0.0
  %1637 = vmatpush.msra.mxu0 0.0
  %1638 = vmatpush.msra.mxu0 0.0
  %1639 = vmatpush.msra.mxu0 0.0
  %1640 = vmatpush.msra.mxu0 0.0
  %1641 = vmatpush.msra.mxu0 0.0
  %1642 = vmatpush.msra.mxu0 %v44
  %1643 = vmatpush.msra.mxu0 %v43
  %1644 = vmatpush.msra.mxu0 %v42
  %1645 = vmatpush.msra.mxu0 %v41
  %1646 = vmatmul.f32.gmra.mxu0 %v1527
  %v1647 = vpop.f32.mrf.mxu0
  %v1648 = vadd.f32 0.0, %v1647
  %1649 = vdwg.mxu0
  %1651 = vrot.lane.b32.xlu0 %v1629, 64
  %v1652 = vpop.permute.xlu0 %1651
  %v1653 = vsel %vm189, %v1652, 0
  %1655 = vmatpush.msra.mxu0 0.0
  %1656 = vmatpush.msra.mxu0 0.0
  %1657 = vmatpush.msra.mxu0 0.0
  %1658 = vmatpush.msra.mxu0 0.0
  %1659 = vmatpush.msra.mxu0 0.0
  %1660 = vmatpush.msra.mxu0 0.0
  %1661 = vmatpush.msra.mxu0 0.0
  %1662 = vmatpush.msra.mxu0 0.0
  %1663 = vmatpush.msra.mxu0 0.0
  %1664 = vmatpush.msra.mxu0 0.0
  %1665 = vmatpush.msra.mxu0 0.0
  %1666 = vmatpush.msra.mxu0 0.0
  %1667 = vmatpush.msra.mxu0 %v40
  %1668 = vmatpush.msra.mxu0 %v39
  %1669 = vmatpush.msra.mxu0 %v38
  %1670 = vmatpush.msra.mxu0 %v37
  %1671 = vmatmul.f32.gmra.mxu0 %v1653
  %v1672 = vpop.f32.mrf.mxu0
  %v1673 = vadd.f32 %v1648, %v1672
  %1674 = vdwg.mxu0
  %v1675 = vadd.f32 %v1673, %v56
  %v1676 = vxor.u32 %v1675, 2147483648
  %v1677 = vmul.f32 %v1676, 1.442695
  %v1678 = vpow.pop %v1677
  %v1679 = vadd.f32 %v1678, 1.0
  %v1680 = vrcp.pop %v1679
  %v1681 = vmul.f32 %v1679, %v1680
  %v1682 = vsub.f32 1.0, %v1681
  %v1683 = vmul.f32 %v1680, %v1682
  %v1684 = vadd.f32 %v1680, %v1683
  %vm1685 = vweird.f32 %v1679
  %vm1686 = vweird.f32 %v1680
  %vm1687 = vmor %vm1685, %vm1686
  %v1688 = vsel %vm1687, %v1680, %v1684
  %v1689 = vand.u32 2147483647, %v1679
  %vm1690 = vcmp.eq.f32.partialorder %v1689, 8.507059e+37
  %v1691 = vand.u32 %v1679, 2147483648
  %v1692 = vor.u32 1.1754944e-38, %v1691
  %v1693 = vsel %vm1690, %v1692, %v1688
  %v1694 = vmul.f32 1.0, %v1693
  %v1695 = vtanh.pop %v1675
  %v1696 = vmul.f32 %v1694, %v1514
  %1698 = vrot.lane.b32.xlu0 %v1695, 32
  %v1699 = vpop.permute.xlu0 %1698
  %v1701 = vmul.f32 %v1694, %v1699
  %1703 = vrot.lane.b32.xlu0 %v1701, 32
  %v1704 = vpop.permute.xlu0 %1703
  %v1706 = vadd.f32 %v1696, %v1704
  %v1707 = vtanh.pop %v1706
  %1709 = vrot.lane.b32.xlu0 %v1707, 32
  %v1710 = vpop.permute.xlu0 %1709
  %v1712 = vmul.f32 %v1694, %v1710
  %1714 = vrot.lane.b32.xlu0 %v1712, 64
  %v1715 = vpop.permute.xlu0 %1714
  %s1717 = scalar_lea.vmem [#allocation3], 72
  %1718 = vst.msk [vmem:[%s1717] sm:$0xff] %vm189, %v1715
  %v1719 = vsel %vm189, %v1715, 0
  %1721 = vmatpush.msra.mxu0 0.0
  %1722 = vmatpush.msra.mxu0 0.0
  %1723 = vmatpush.msra.mxu0 0.0
  %1724 = vmatpush.msra.mxu0 0.0
  %1725 = vmatpush.msra.mxu0 0.0
  %1726 = vmatpush.msra.mxu0 0.0
  %1727 = vmatpush.msra.mxu0 0.0
  %1728 = vmatpush.msra.mxu0 0.0
  %1729 = vmatpush.msra.mxu0 0.0
  %1730 = vmatpush.msra.mxu0 0.0
  %1731 = vmatpush.msra.mxu0 0.0
  %1732 = vmatpush.msra.mxu0 0.0
  %1733 = vmatpush.msra.mxu0 %v50
  %1734 = vmatpush.msra.mxu0 %v49
  %1735 = vmatpush.msra.mxu0 %v48
  %1736 = vmatpush.msra.mxu0 %v47
  %1737 = vmatmul.f32.gmra.mxu0 %v1719
  %v1738 = vpop.f32.mrf.mxu0
  %v1739 = vadd.f32 %v59, %v1738
  %1740 = vdwg.mxu0
  %v1742 = vsel %vm69, %v1739, 0
  %1744 = vmatpush.msra.mxu0 0.0
  %1745 = vmatpush.msra.mxu0 0.0
  %1746 = vmatpush.msra.mxu0 0.0
  %1747 = vmatpush.msra.mxu0 0.0
  %1748 = vmatpush.msra.mxu0 0.0
  %1749 = vmatpush.msra.mxu0 0.0
  %1750 = vmatpush.msra.mxu0 0.0
  %1751 = vmatpush.msra.mxu0 0.0
  %1752 = vmatpush.msra.mxu0 0.0
  %1753 = vmatpush.msra.mxu0 0.0
  %1754 = vmatpush.msra.mxu0 0.0
  %1755 = vmatpush.msra.mxu0 0.0
  %1756 = vmatpush.msra.mxu0 0.0
  %1757 = vmatpush.msra.mxu0 0.0
  %1758 = vmatpush.msra.mxu0 0.0
  %1759 = vmatpush.msra.mxu0 %v96
  %1760 = vmatmul.f32.gmra.mxu0 %v1742
  %v1761 = vpop.f32.mrf.mxu0
  %v1762 = vadd.f32 0.0, %v1761
  %1763 = vdwg.mxu0
  %1764 = vmatpush.msra.mxu0 0.0
  %1765 = vmatpush.msra.mxu0 0.0
  %1766 = vmatpush.msra.mxu0 0.0
  %1767 = vmatpush.msra.mxu0 0.0
  %1768 = vmatpush.msra.mxu0 0.0
  %1769 = vmatpush.msra.mxu0 0.0
  %1770 = vmatpush.msra.mxu0 0.0
  %1771 = vmatpush.msra.mxu0 0.0
  %1772 = vmatpush.msra.mxu0 0.0
  %1773 = vmatpush.msra.mxu0 0.0
  %1774 = vmatpush.msra.mxu0 0.0
  %1775 = vmatpush.msra.mxu0 0.0
  %1776 = vmatpush.msra.mxu0 %v36
  %1777 = vmatpush.msra.mxu0 %v35
  %1778 = vmatpush.msra.mxu0 %v34
  %1779 = vmatpush.msra.mxu0 %v33
  %1780 = vmatmul.f32.gmra.mxu0 %v1653
  %v1781 = vpop.f32.mrf.mxu0
  %v1782 = vadd.f32 %v1762, %v1781
  %1783 = vdwg.mxu0
  %v1784 = vadd.f32 %v1782, %v53
  %v1785 = vxor.u32 %v1784, 2147483648
  %v1786 = vmul.f32 %v1785, 1.442695
  %v1787 = vpow.pop %v1786
  %v1788 = vadd.f32 %v1787, 1.0
  %v1789 = vrcp.pop %v1788
  %v1790 = vmul.f32 %v1788, %v1789
  %v1791 = vsub.f32 1.0, %v1790
  %v1792 = vmul.f32 %v1789, %v1791
  %v1793 = vadd.f32 %v1789, %v1792
  %vm1794 = vweird.f32 %v1788
  %vm1795 = vweird.f32 %v1789
  %vm1796 = vmor %vm1794, %vm1795
  %v1797 = vsel %vm1796, %v1789, %v1793
  %v1798 = vand.u32 2147483647, %v1788
  %vm1799 = vcmp.eq.f32.partialorder %v1798, 8.507059e+37
  %v1800 = vand.u32 %v1788, 2147483648
  %v1801 = vor.u32 1.1754944e-38, %v1800
  %v1802 = vsel %vm1799, %v1801, %v1797
  %v1803 = vmul.f32 1.0, %v1802
  %v1804 = vtanh.pop %v1784
  %v1805 = vmul.f32 %v1803, %v1623
  %1807 = vrot.lane.b32.xlu0 %v1804, 32
  %v1808 = vpop.permute.xlu0 %1807
  %v1810 = vmul.f32 %v1803, %v1808
  %1812 = vrot.lane.b32.xlu0 %v1810, 32
  %v1813 = vpop.permute.xlu0 %1812
  %v1815 = vadd.f32 %v1805, %v1813
  %v1816 = vtanh.pop %v1815
  %1818 = vrot.lane.b32.xlu0 %v1816, 32
  %v1819 = vpop.permute.xlu0 %1818
  %v1821 = vmul.f32 %v1803, %v1819
  %1822 = vmatpush.msra.mxu0 0.0
  %1823 = vmatpush.msra.mxu0 0.0
  %1824 = vmatpush.msra.mxu0 0.0
  %1825 = vmatpush.msra.mxu0 0.0
  %1826 = vmatpush.msra.mxu0 0.0
  %1827 = vmatpush.msra.mxu0 0.0
  %1828 = vmatpush.msra.mxu0 0.0
  %1829 = vmatpush.msra.mxu0 0.0
  %1830 = vmatpush.msra.mxu0 0.0
  %1831 = vmatpush.msra.mxu0 0.0
  %1832 = vmatpush.msra.mxu0 0.0
  %1833 = vmatpush.msra.mxu0 0.0
  %1834 = vmatpush.msra.mxu0 %v44
  %1835 = vmatpush.msra.mxu0 %v43
  %1836 = vmatpush.msra.mxu0 %v42
  %1837 = vmatpush.msra.mxu0 %v41
  %1838 = vmatmul.f32.gmra.mxu0 %v1719
  %v1839 = vpop.f32.mrf.mxu0
  %v1840 = vadd.f32 0.0, %v1839
  %1841 = vdwg.mxu0
  %1843 = vrot.lane.b32.xlu0 %v1821, 64
  %v1844 = vpop.permute.xlu0 %1843
  %v1845 = vsel %vm189, %v1844, 0
  %1847 = vmatpush.msra.mxu0 0.0
  %1848 = vmatpush.msra.mxu0 0.0
  %1849 = vmatpush.msra.mxu0 0.0
  %1850 = vmatpush.msra.mxu0 0.0
  %1851 = vmatpush.msra.mxu0 0.0
  %1852 = vmatpush.msra.mxu0 0.0
  %1853 = vmatpush.msra.mxu0 0.0
  %1854 = vmatpush.msra.mxu0 0.0
  %1855 = vmatpush.msra.mxu0 0.0
  %1856 = vmatpush.msra.mxu0 0.0
  %1857 = vmatpush.msra.mxu0 0.0
  %1858 = vmatpush.msra.mxu0 0.0
  %1859 = vmatpush.msra.mxu0 %v40
  %1860 = vmatpush.msra.mxu0 %v39
  %1861 = vmatpush.msra.mxu0 %v38
  %1862 = vmatpush.msra.mxu0 %v37
  %1863 = vmatmul.f32.gmra.mxu0 %v1845
  %v1864 = vpop.f32.mrf.mxu0
  %v1865 = vadd.f32 %v1840, %v1864
  %1866 = vdwg.mxu0
  %v1867 = vadd.f32 %v1865, %v56
  %v1868 = vxor.u32 %v1867, 2147483648
  %v1869 = vmul.f32 %v1868, 1.442695
  %v1870 = vpow.pop %v1869
  %v1871 = vadd.f32 %v1870, 1.0
  %v1872 = vrcp.pop %v1871
  %v1873 = vmul.f32 %v1871, %v1872
  %v1874 = vsub.f32 1.0, %v1873
  %v1875 = vmul.f32 %v1872, %v1874
  %v1876 = vadd.f32 %v1872, %v1875
  %vm1877 = vweird.f32 %v1871
  %vm1878 = vweird.f32 %v1872
  %vm1879 = vmor %vm1877, %vm1878
  %v1880 = vsel %vm1879, %v1872, %v1876
  %v1881 = vand.u32 2147483647, %v1871
  %vm1882 = vcmp.eq.f32.partialorder %v1881, 8.507059e+37
  %v1883 = vand.u32 %v1871, 2147483648
  %v1884 = vor.u32 1.1754944e-38, %v1883
  %v1885 = vsel %vm1882, %v1884, %v1880
  %v1886 = vmul.f32 1.0, %v1885
  %v1887 = vtanh.pop %v1867
  %v1888 = vmul.f32 %v1886, %v1706
  %1890 = vrot.lane.b32.xlu0 %v1887, 32
  %v1891 = vpop.permute.xlu0 %1890
  %v1893 = vmul.f32 %v1886, %v1891
  %1895 = vrot.lane.b32.xlu0 %v1893, 32
  %v1896 = vpop.permute.xlu0 %1895
  %v1898 = vadd.f32 %v1888, %v1896
  %v1899 = vtanh.pop %v1898
  %1901 = vrot.lane.b32.xlu0 %v1899, 32
  %v1902 = vpop.permute.xlu0 %1901
  %v1904 = vmul.f32 %v1886, %v1902
  %1906 = vrot.lane.b32.xlu0 %v1904, 64
  %v1907 = vpop.permute.xlu0 %1906
  %s1909 = scalar_lea.vmem [#allocation3], 80
  %1910 = vst.msk [vmem:[%s1909] sm:$0xff] %vm189, %v1907
  %v1911 = vld [vmem:[#allocation3] sm:$0xff]
  %v1912 = vld [vmem:[#allocation3 + $0x8] sm:$0xff]
  %v1913 = vld [vmem:[#allocation3 + $0x10] sm:$0xff]
  %v1914 = vld [vmem:[#allocation3 + $0x18] sm:$0xff]
  %v1915 = vld [vmem:[#allocation3 + $0x20] sm:$0xff]
  %v1916 = vld [vmem:[#allocation3 + $0x28] sm:$0xff]
  %v1917 = vld [vmem:[#allocation3 + $0x30] sm:$0xff]
  %v1918 = vld [vmem:[#allocation3 + $0x38] sm:$0xff]
  %v1919 = vld [vmem:[#allocation3 + $0x40] sm:$0xff]
  %v1920 = vld [vmem:[#allocation3 + $0x48] sm:$0xff]
  %v1921 = vld [vmem:[#allocation3 + $0x50] sm:$0xff]
  %v1923 = vsel %vm189, %v1911, 0
  %v1926 = vsel %vm189, %v1912, 0
  %v1929 = vsel %vm189, %v1913, 0
  %v1932 = vsel %vm189, %v1914, 0
  %v1935 = vsel %vm189, %v1915, 0
  %v1938 = vsel %vm189, %v1916, 0
  %v1941 = vsel %vm189, %v1917, 0
  %v1944 = vsel %vm189, %v1918, 0
  %v1947 = vsel %vm189, %v1919, 0
  %v1950 = vsel %vm189, %v1920, 0
  %v1953 = vsel %vm189, %v1921, 0
  %1955 = vmatpush.msra.mxu0 0.0
  %1956 = vmatpush.msra.mxu0 0.0
  %1957 = vmatpush.msra.mxu0 0.0
  %1958 = vmatpush.msra.mxu0 0.0
  %1959 = vmatpush.msra.mxu0 0.0
  %1960 = vmatpush.msra.mxu0 0.0
  %1961 = vmatpush.msra.mxu0 0.0
  %1962 = vmatpush.msra.mxu0 0.0
  %1963 = vmatpush.msra.mxu0 0.0
  %1964 = vmatpush.msra.mxu0 0.0
  %1965 = vmatpush.msra.mxu0 0.0
  %1966 = vmatpush.msra.mxu0 0.0
  %1967 = vmatpush.msra.mxu0 %v50
  %1968 = vmatpush.msra.mxu0 %v49
  %1969 = vmatpush.msra.mxu0 %v48
  %1970 = vmatpush.msra.mxu0 %v47
  %1971 = vmatmul.f32.gmra.mxu0 %v1923
  %v1972 = vpop.f32.mrf.mxu0
  %v1973 = vadd.f32 %v59, %v1972
  %1974 = vmatmul.f32.gmra.mxu0 %v1926
  %v1975 = vpop.f32.mrf.mxu0
  %v1976 = vadd.f32 %v59, %v1975
  %1977 = vmatmul.f32.gmra.mxu0 %v1929
  %v1978 = vpop.f32.mrf.mxu0
  %v1979 = vadd.f32 %v59, %v1978
  %1980 = vmatmul.f32.gmra.mxu0 %v1932
  %v1981 = vpop.f32.mrf.mxu0
  %v1982 = vadd.f32 %v59, %v1981
  %1983 = vmatmul.f32.gmra.mxu0 %v1935
  %v1984 = vpop.f32.mrf.mxu0
  %v1985 = vadd.f32 %v59, %v1984
  %1986 = vmatmul.f32.gmra.mxu0 %v1938
  %v1987 = vpop.f32.mrf.mxu0
  %v1988 = vadd.f32 %v59, %v1987
  %1989 = vmatmul.f32.gmra.mxu0 %v1941
  %v1990 = vpop.f32.mrf.mxu0
  %v1991 = vadd.f32 %v59, %v1990
  %1992 = vmatmul.f32.gmra.mxu0 %v1944
  %v1993 = vpop.f32.mrf.mxu0
  %v1994 = vadd.f32 %v59, %v1993
  %1995 = vmatmul.f32.gmra.mxu0 %v1947
  %v1996 = vpop.f32.mrf.mxu0
  %v1997 = vadd.f32 %v59, %v1996
  %1998 = vmatmul.f32.gmra.mxu0 %v1950
  %v1999 = vpop.f32.mrf.mxu0
  %v2000 = vadd.f32 %v59, %v1999
  %2001 = vmatmul.f32.gmra.mxu0 %v1953
  %v2002 = vpop.f32.mrf.mxu0
  %v2003 = vadd.f32 %v59, %v2002
  %2004 = vdwg.mxu0
  %2005 = vst.msk [vmem:[%s9] sm:$0xff] %vm69, %v1973
  %2006 = vst.msk [vmem:[%s9 + $0x8] sm:$0xff] %vm69, %v1976
  %2007 = vst.msk [vmem:[%s9 + $0x10] sm:$0xff] %vm69, %v1979
  %2008 = vst.msk [vmem:[%s9 + $0x18] sm:$0xff] %vm69, %v1982
  %2009 = vst.msk [vmem:[%s9 + $0x20] sm:$0xff] %vm69, %v1985
  %2010 = vst.msk [vmem:[%s9 + $0x28] sm:$0xff] %vm69, %v1988
  %2011 = vst.msk [vmem:[%s9 + $0x30] sm:$0xff] %vm69, %v1991
  %2012 = vst.msk [vmem:[%s9 + $0x38] sm:$0xff] %vm69, %v1994
  %2013 = vst.msk [vmem:[%s9 + $0x40] sm:$0xff] %vm69, %v1997
  %2014 = vst.msk [vmem:[%s9 + $0x48] sm:$0xff] %vm69, %v2000
  %2015 = vst.msk [vmem:[%s9 + $0x50] sm:$0xff] %vm69, %v2003
  // Predicated region
  $region38: #{tpu_custom_call.1} parent=0 // pred_check
    _
  $region39: #{tpu_custom_call.1} parent=0 // pred_check_branch
    %2017 = sbr.rel (0) target = $region41
  $region40: #{tpu_custom_call.1} parent=0 // pred_region
    _
  $region41: #{tpu_custom_call.1} parent=0 // pred_fallthru
    _
  // Predicated region
  $region42: #{tpu_custom_call.1} parent=0 // pred_check
    _
  $region43: #{tpu_custom_call.1} parent=0 // pred_check_branch
    %2019 = sbr.rel (0) target = $region45
  $region44: #{tpu_custom_call.1} parent=0 // pred_region
    _
  $region45: #{tpu_custom_call.1} parent=0 // pred_fallthru
    _

</llo_original>
